<compile_context>
chip_gen: v5e
topology: v5e:2x2
jax: 0.10.0
libtpu: 0.0.40
codegen_flags: <defaults>
</compile_context>

<pallas_src>
import jax
import jax.numpy as jnp
import numpy as np
from jax.experimental import pallas as pl
from jax.experimental.pallas import tpu as pltpu

_NEG_SLOPE = 0.33
_VMEM_LIMIT_BYTES = 32 * 1024 * 1024   # raises v5e's 16 MiB scoped default; safe everywhere
_ROW_BLOCK_BUDGET = 4 * 1024 * 1024    # per-step working-set budget for the fused kernel


def _leaky_relu(v):
    return jnp.where(v >= 0, v, v * _NEG_SLOPE)


def _pick_row_tile(n_rows, bytes_per_row, budget=_ROW_BLOCK_BUDGET, min_steps=2):
    """Rows per grid step: as many as the VMEM budget allows (8-aligned sublane dim),
    while keeping >= min_steps grid steps so both megacore TensorCores get work."""
    th = max(1, min(n_rows, budget // max(int(bytes_per_row), 1)))
    if n_rows >= 2 * min_steps:
        th = min(th, pl.cdiv(n_rows, min_steps))
    if th >= n_rows:
        return n_rows
    th = max(8, (th // 8) * 8)
    return min(th, n_rows)


# --------------------------------------------------------------------------------------
# K0: E2E row conv (1 x d) and column conv (d x 1).  Gridless; inputs/outputs are tiny.
# --------------------------------------------------------------------------------------
def _e2e_row_col_kernel(x_ref, w1_ref, w2_ref, b1_ref, b2_ref, a_ref, bb_ref):
    # x: (B,C,H,W)  w1: (C,W,P1)  w2: (C,P1,H)  b1: (1,P1)  b2: (P1,1)
    # a: (B,H,P1)   bb: (B,P1,W)
    B, C, H, W = x_ref.shape
    P1 = w1_ref.shape[-1]
    b1 = b1_ref[...]
    b2 = b2_ref[...]
    for b in range(B):
        acc_a = jnp.zeros((H, P1), jnp.float32)
        acc_c = jnp.zeros((P1, W), jnp.float32)
        for c in range(C):
            xc = x_ref[b, c]                                                   # (H, W)
            acc_a = acc_a + jnp.dot(xc, w1_ref[c],
                                    preferred_element_type=jnp.float32)        # (H, P1)
            acc_c = acc_c + jnp.dot(w2_ref[c], xc,
                                    preferred_element_type=jnp.float32)        # (P1, W)
        a_ref[b] = (acc_a + b1).astype(a_ref.dtype)
        bb_ref[b] = (acc_c + b2).astype(bb_ref.dtype)


# --------------------------------------------------------------------------------------
# K1: fused  e2e = lrelu(a[b,h,p] + bb[b,p,w])  and  E2N (1 x d conv) + bias + lrelu.
#     Row-tiled grid; the e2e tile lives only in VMEM.
# --------------------------------------------------------------------------------------
def _e2e_e2n_kernel(a_ref, bbf_ref, exp_ref, w3_ref, b3_ref, o_ref):
    # a: (B,TH,P1)  bbf: (B,1,K1)  exp: (P1,K1) one-hot expansion  w3: (K1,P2)
    # b3: (1,P2)    o: (B,TH,P2)   with K1 = P1*W flattened in (p, w) order
    B = a_ref.shape[0]
    expand = exp_ref[...]
    w3 = w3_ref[...]
    b3 = b3_ref[...]
    for b in range(B):
        # broadcast a[b,h,p] along w as a matmul with the 0/1 expansion matrix (MXU).
        a_exp = jnp.dot(a_ref[b], expand, preferred_element_type=jnp.float32)   # (TH, K1)
        e2e = _leaky_relu(a_exp + bbf_ref[b])                                   # (TH, K1)
        acc = jnp.dot(e2e, w3, preferred_element_type=jnp.float32)              # (TH, P2)
        o_ref[b] = _leaky_relu(acc + b3).astype(o_ref.dtype)


# --------------------------------------------------------------------------------------
# K2: N2G (d x 1 conv) + dense1 + dense2 + log_softmax.  Gridless; everything is tiny.
# --------------------------------------------------------------------------------------
def _head_kernel(n_ref, w4_ref, b4_ref, wd1_ref, bd1_ref, wd2_ref, bd2_ref, o_ref):
    # n: (B,K2)  w4: (K2,R)  wd1: (R,D1)  wd2: (D1,D2)  biases: (1,*)  o: (B,D2)
    h = jnp.dot(n_ref[...], w4_ref[...], preferred_element_type=jnp.float32)    # (B, R)
    h = _leaky_relu(h + b4_ref[...])
    h = jnp.dot(h, wd1_ref[...], preferred_element_type=jnp.float32)            # (B, D1)
    h = _leaky_relu(h + bd1_ref[...])
    h = jnp.dot(h, wd2_ref[...], preferred_element_type=jnp.float32)            # (B, D2)
    h = _leaky_relu(h + bd2_ref[...])
    m = jnp.max(h, axis=-1, keepdims=True)
    lse = m + jnp.log(jnp.sum(jnp.exp(h - m), axis=-1, keepdims=True))
    o_ref[...] = (h - lse).astype(o_ref.dtype)


# --------------------------------------------------------------------------------------
# Glue: full BrainNetCNN forward.
# --------------------------------------------------------------------------------------
def brainnetcnn_forward(x, params):
    """x: (B, C, d, d) NCHW (C == 1 in the torch model).  Returns (B, 2) log-probs.

    params = (w1, b1, w2, b2, w3, b3, w4, b4, wd1, bd1, wd2, bd2) with torch shapes:
    w1 (P1,C,1,d), w2 (P1,C,d,1), w3 (P2,P1,1,d), w4 (R,P2,d,1), wd1 (D1,R), wd2 (D2,D1).
    """
    w1, b1, w2, b2, w3, b3, w4, b4, wd1, bd1, wd2, bd2 = params
    B, C, H, W = x.shape
    assert H == W, "BrainNetCNN assumes square connectomes (H == W == d)"
    d = H
    P1 = w1.shape[0]
    P2 = w3.shape[0]
    R = w4.shape[0]
    D1 = wd1.shape[0]
    D2 = wd2.shape[0]
    f32 = jnp.float32
    x = x.astype(f32)

    # ---- K0: row/column convs of x (native NCHW read, canonical (M,K)x(K,N) dots) -----
    w1k = jnp.transpose(w1[:, :, 0, :], (1, 2, 0)).astype(f32)       # (C, W, P1)
    w2k = jnp.transpose(w2[:, :, :, 0], (1, 0, 2)).astype(f32)       # (C, P1, H)
    b1k = b1.reshape(1, P1).astype(f32)
    b2k = b2.reshape(P1, 1).astype(f32)
    a, bb = pl.pallas_call(
        _e2e_row_col_kernel,
        out_shape=(jax.ShapeDtypeStruct((B, d, P1), f32),
                   jax.ShapeDtypeStruct((B, P1, d), f32)),
    )(x, w1k, w2k, b1k, b2k)

    # ---- K1: fused e2e-combine + leaky_relu + E2N, tiled over the d "row" axis --------
    K1 = P1 * d                                                      # (p, w) flat order
    bbf = bb.reshape(B, 1, K1)                                       # free trailing merge
    expand = jnp.asarray(np.repeat(np.eye(P1, dtype=np.float32), d, axis=1))  # (P1, K1)
    w3k = w3[:, :, 0, :].reshape(P2, K1).T.astype(f32)               # (K1, P2)
    b3k = b3.reshape(1, P2).astype(f32)
    # per-row working set: a/out rows + the two (row, K1) f32 temporaries per live batch
    row_bytes = B * (P1 + P2) * 4 + 3 * K1 * 4
    th = _pick_row_tile(d, row_bytes)
    e2n = pl.pallas_call(
        _e2e_e2n_kernel,
        out_shape=jax.ShapeDtypeStruct((B, d, P2), f32),
        grid=(pl.cdiv(d, th),),
        in_specs=[pl.BlockSpec((B, th, P1), lambda i: (0, i, 0)),
                  pl.BlockSpec((B, 1, K1), lambda i: (0, 0, 0)),
                  pl.BlockSpec((P1, K1), lambda i: (0, 0)),
                  pl.BlockSpec((K1, P2), lambda i: (0, 0)),
                  pl.BlockSpec((1, P2), lambda i: (0, 0))],
        out_specs=pl.BlockSpec((B, th, P2), lambda i: (0, i, 0)),
        compiler_params=pltpu.CompilerParams(
            dimension_semantics=("parallel",),
            vmem_limit_bytes=_VMEM_LIMIT_BYTES),
    )(a, bbf, expand, w3k, b3k)

    # ---- K2: N2G + dense1 + dense2 + log_softmax ---------------------------------------
    K2 = d * P2
    n_in = e2n.reshape(B, K2)                                        # free merge, (h, q)
    # repack W4 so its flatten order matches n_in's (h, q) order; tiny one-time weight op
    w4k = jnp.transpose(w4[:, :, :, 0], (2, 1, 0)).reshape(K2, R).astype(f32)
    b4k = b4.reshape(1, R).astype(f32)
    wd1k = wd1.T.astype(f32)                                         # (R, D1)
    bd1k = bd1.reshape(1, D1).astype(f32)
    wd2k = wd2.T.astype(f32)                                         # (D1, D2)
    bd2k = bd2.reshape(1, D2).astype(f32)
    out = pl.pallas_call(
        _head_kernel,
        out_shape=jax.ShapeDtypeStruct((B, D2), f32),
    )(n_in, w4k, b4k, wd1k, bd1k, wd2k, bd2k)
    return out


# --------------------------------------------------------------------------------------
# Pure-JAX reference (same semantics as the PyTorch module).
# --------------------------------------------------------------------------------------
def _reference_forward(x, params):
    w1, b1, w2, b2, w3, b3, w4, b4, wd1, bd1, wd2, bd2 = params
    lrelu = lambda v: jnp.where(v >= 0, v, v * _NEG_SLOPE)
    hp = jax.lax.Precision.HIGHEST
    a = jnp.einsum("bchw,pcw->bph", x, w1[:, :, 0, :], precision=hp) + b1[None, :, None]
    bb = jnp.einsum("bchw,pch->bpw", x, w2[:, :, :, 0], precision=hp) + b2[None, :, None]
    e2e = lrelu(a[:, :, :, None] + bb[:, :, None, :])                        # (B, P1, d, d)
    e2n = lrelu(jnp.einsum("bchw,pcw->bph", e2e, w3[:, :, 0, :], precision=hp)
                + b3[None, :, None])                                         # (B, P2, d)
    n2g = lrelu(jnp.einsum("bch,pch->bp", e2n, w4[:, :, :, 0], precision=hp)
                + b4[None, :])                                               # (B, R)
    d1 = lrelu(jnp.dot(n2g, wd1.T, precision=hp) + bd1[None, :])
    d2 = lrelu(jnp.dot(d1, wd2.T, precision=hp) + bd2[None, :])
    return jax.nn.log_softmax(d2, axis=1)


if __name__ == "__main__":
    key = jax.random.PRNGKey(0)
    ks = jax.random.split(key, 14)

    # Small shapes consistent with the module: BrainNetCNN hardwires C=1 and the channel
    # widths 32 / 64 / 128 / 64 / 2; use d=16 instead of 90 for the demo.
    B, C, d = 2, 1, 16
    P1, P2, R, D1, D2 = 32, 64, 128, 64, 2

    def init(k, shape, scale=0.1):
        return scale * jax.random.normal(k, shape, dtype=jnp.float32)

    x = jax.random.normal(ks[0], (B, C, d, d), dtype=jnp.float32)
    params = (
        init(ks[1], (P1, C, 1, d)), init(ks[2], (P1,)),      # e2econv1.cnn1
        init(ks[3], (P1, C, d, 1)), init(ks[4], (P1,)),      # e2econv1.cnn2
        init(ks[5], (P2, P1, 1, d)), init(ks[6], (P2,)),     # E2N
        init(ks[7], (R, P2, d, 1)), init(ks[8], (R,)),       # N2G
        init(ks[9], (D1, R)), init(ks[10], (D1,)),           # dense1
        init(ks[11], (D2, D1)), init(ks[12], (D2,)),         # dense2
    )

    out = jax.jit(brainnetcnn_forward)(x, params)
    out = jax.block_until_ready(out)

    ref = _reference_forward(x, params)
    assert out.shape == (B, D2), out.shape
    # tolerance covers possible MXU bf16-pass rounding of f32 matmuls while still
    # catching any layout / weight-packing mistake (those give O(0.1+) differences).
    np.testing.assert_allclose(np.asarray(out), np.asarray(ref), rtol=5e-2, atol=5e-2)

    print("KERNEL_OK")
</pallas_src>

<mosaic_0001>
module attributes {stable_mosaic.version = 11 : i64} {
  func.func @_e2e_row_col_kernel(%arg0: memref<2x1x16x16xf32, #tpu.memory_space<vmem>>, %arg1: memref<1x16x32xf32, #tpu.memory_space<vmem>>, %arg2: memref<1x32x16xf32, #tpu.memory_space<vmem>>, %arg3: memref<1x32xf32, #tpu.memory_space<vmem>>, %arg4: memref<32x1xf32, #tpu.memory_space<vmem>>, %arg5: memref<2x16x32xf32, #tpu.memory_space<vmem>>, %arg6: memref<2x32x16xf32, #tpu.memory_space<vmem>>) attributes {dimension_semantics = [], scalar_prefetch = 0 : i64, scratch_operands = 0 : i64, tpu.core_type = #tpu.core_type<tc>} {
    %c0 = arith.constant 0 : index
    %c0_0 = arith.constant 0 : index
    %0 = vector.load %arg3[%c0, %c0_0] : memref<1x32xf32, #tpu.memory_space<vmem>>, vector<1x32xf32>
    %c0_1 = arith.constant 0 : index
    %c0_2 = arith.constant 0 : index
    %1 = vector.load %arg4[%c0_1, %c0_2] : memref<32x1xf32, #tpu.memory_space<vmem>>, vector<32x1xf32>
    %cst = arith.constant 0.000000e+00 : f32
    %2 = vector.broadcast %cst : f32 to vector<16x32xf32>
    %cst_3 = arith.constant 0.000000e+00 : f32
    %3 = vector.broadcast %cst_3 : f32 to vector<32x16xf32>
    %c0_4 = arith.constant 0 : index
    %c0_5 = arith.constant 0 : index
    %c0_6 = arith.constant 0 : index
    %c0_7 = arith.constant 0 : index
    %4 = vector.load %arg0[%c0_4, %c0_5, %c0_6, %c0_7] : memref<2x1x16x16xf32, #tpu.memory_space<vmem>>, vector<1x1x16x16xf32>
    %5 = vector.shape_cast %4 : vector<1x1x16x16xf32> to vector<16x16xf32>
    %c0_8 = arith.constant 0 : index
    %c0_9 = arith.constant 0 : index
    %c0_10 = arith.constant 0 : index
    %6 = vector.load %arg1[%c0_8, %c0_9, %c0_10] : memref<1x16x32xf32, #tpu.memory_space<vmem>>, vector<1x16x32xf32>
    %7 = vector.shape_cast %6 : vector<1x16x32xf32> to vector<16x32xf32>
    %cst_11 = arith.constant dense<0.000000e+00> : vector<16x32xf32>
    %8 = tpu.matmul %5, %7, %cst_11 {dimension_numbers = #tpu.dot_dimension_numbers<[1], [0], [0], [1], [0, 0, 1, 1], [], []>} : vector<16x16xf32>, vector<16x32xf32>, vector<16x32xf32> -> vector<16x32xf32>
    %9 = arith.addf %2, %8 : vector<16x32xf32>
    %c0_12 = arith.constant 0 : index
    %c0_13 = arith.constant 0 : index
    %c0_14 = arith.constant 0 : index
    %10 = vector.load %arg2[%c0_12, %c0_13, %c0_14] : memref<1x32x16xf32, #tpu.memory_space<vmem>>, vector<1x32x16xf32>
    %11 = vector.shape_cast %10 : vector<1x32x16xf32> to vector<32x16xf32>
    %cst_15 = arith.constant dense<0.000000e+00> : vector<32x16xf32>
    %12 = tpu.matmul %11, %5, %cst_15 {dimension_numbers = #tpu.dot_dimension_numbers<[1], [0], [0], [1], [0, 0, 1, 1], [], []>} : vector<32x16xf32>, vector<16x16xf32>, vector<32x16xf32> -> vector<32x16xf32>
    %13 = arith.addf %3, %12 : vector<32x16xf32>
    %14 = vector.broadcast %0 : vector<1x32xf32> to vector<16x32xf32>
    %15 = arith.addf %9, %14 : vector<16x32xf32>
    %c0_16 = arith.constant 0 : index
    %c0_17 = arith.constant 0 : index
    %c0_18 = arith.constant 0 : index
    %16 = vector.load %arg5[%c0_16, %c0_17, %c0_18] : memref<2x16x32xf32, #tpu.memory_space<vmem>>, vector<1x16x32xf32>
    %17 = vector.shape_cast %16 : vector<1x16x32xf32> to vector<16x32xf32>
    %18 = vector.shape_cast %15 : vector<16x32xf32> to vector<1x16x32xf32>
    tpu.vector_store %arg5[%c0_16, %c0_17, %c0_18], %18 {strides = array<i32>} : memref<2x16x32xf32, #tpu.memory_space<vmem>>, vector<1x16x32xf32>,
    %19 = vector.broadcast %1 : vector<32x1xf32> to vector<32x16xf32>
    %20 = arith.addf %13, %19 : vector<32x16xf32>
    %c0_19 = arith.constant 0 : index
    %c0_20 = arith.constant 0 : index
    %c0_21 = arith.constant 0 : index
    %21 = vector.load %arg6[%c0_19, %c0_20, %c0_21] : memref<2x32x16xf32, #tpu.memory_space<vmem>>, vector<1x32x16xf32>
    %22 = vector.shape_cast %21 : vector<1x32x16xf32> to vector<32x16xf32>
    %23 = vector.shape_cast %20 : vector<32x16xf32> to vector<1x32x16xf32>
    tpu.vector_store %arg6[%c0_19, %c0_20, %c0_21], %23 {strides = array<i32>} : memref<2x32x16xf32, #tpu.memory_space<vmem>>, vector<1x32x16xf32>,
    %cst_22 = arith.constant 0.000000e+00 : f32
    %24 = vector.broadcast %cst_22 : f32 to vector<16x32xf32>
    %cst_23 = arith.constant 0.000000e+00 : f32
    %25 = vector.broadcast %cst_23 : f32 to vector<32x16xf32>
    %c1 = arith.constant 1 : index
    %c0_24 = arith.constant 0 : index
    %c0_25 = arith.constant 0 : index
    %c0_26 = arith.constant 0 : index
    %26 = vector.load %arg0[%c1, %c0_24, %c0_25, %c0_26] : memref<2x1x16x16xf32, #tpu.memory_space<vmem>>, vector<1x1x16x16xf32>
    %27 = vector.shape_cast %26 : vector<1x1x16x16xf32> to vector<16x16xf32>
    %c0_27 = arith.constant 0 : index
    %c0_28 = arith.constant 0 : index
    %c0_29 = arith.constant 0 : index
    %28 = vector.load %arg1[%c0_27, %c0_28, %c0_29] : memref<1x16x32xf32, #tpu.memory_space<vmem>>, vector<1x16x32xf32>
    %29 = vector.shape_cast %28 : vector<1x16x32xf32> to vector<16x32xf32>
    %cst_30 = arith.constant dense<0.000000e+00> : vector<16x32xf32>
    %30 = tpu.matmul %27, %29, %cst_30 {dimension_numbers = #tpu.dot_dimension_numbers<[1], [0], [0], [1], [0, 0, 1, 1], [], []>} : vector<16x16xf32>, vector<16x32xf32>, vector<16x32xf32> -> vector<16x32xf32>
    %31 = arith.addf %24, %30 : vector<16x32xf32>
    %c0_31 = arith.constant 0 : index
    %c0_32 = arith.constant 0 : index
    %c0_33 = arith.constant 0 : index
    %32 = vector.load %arg2[%c0_31, %c0_32, %c0_33] : memref<1x32x16xf32, #tpu.memory_space<vmem>>, vector<1x32x16xf32>
    %33 = vector.shape_cast %32 : vector<1x32x16xf32> to vector<32x16xf32>
    %cst_34 = arith.constant dense<0.000000e+00> : vector<32x16xf32>
    %34 = tpu.matmul %33, %27, %cst_34 {dimension_numbers = #tpu.dot_dimension_numbers<[1], [0], [0], [1], [0, 0, 1, 1], [], []>} : vector<32x16xf32>, vector<16x16xf32>, vector<32x16xf32> -> vector<32x16xf32>
    %35 = arith.addf %25, %34 : vector<32x16xf32>
    %36 = vector.broadcast %0 : vector<1x32xf32> to vector<16x32xf32>
    %37 = arith.addf %31, %36 : vector<16x32xf32>
    %c1_35 = arith.constant 1 : index
    %c0_36 = arith.constant 0 : index
    %c0_37 = arith.constant 0 : index
    %38 = vector.load %arg5[%c1_35, %c0_36, %c0_37] : memref<2x16x32xf32, #tpu.memory_space<vmem>>, vector<1x16x32xf32>
    %39 = vector.shape_cast %38 : vector<1x16x32xf32> to vector<16x32xf32>
    %40 = vector.shape_cast %37 : vector<16x32xf32> to vector<1x16x32xf32>
    tpu.vector_store %arg5[%c1_35, %c0_36, %c0_37], %40 {strides = array<i32>} : memref<2x16x32xf32, #tpu.memory_space<vmem>>, vector<1x16x32xf32>,
    %41 = vector.broadcast %1 : vector<32x1xf32> to vector<32x16xf32>
    %42 = arith.addf %35, %41 : vector<32x16xf32>
    %c1_38 = arith.constant 1 : index
    %c0_39 = arith.constant 0 : index
    %c0_40 = arith.constant 0 : index
    %43 = vector.load %arg6[%c1_38, %c0_39, %c0_40] : memref<2x32x16xf32, #tpu.memory_space<vmem>>, vector<1x32x16xf32>
    %44 = vector.shape_cast %43 : vector<1x32x16xf32> to vector<32x16xf32>
    %45 = vector.shape_cast %42 : vector<32x16xf32> to vector<1x32x16xf32>
    tpu.vector_store %arg6[%c1_38, %c0_39, %c0_40], %45 {strides = array<i32>} : memref<2x32x16xf32, #tpu.memory_space<vmem>>, vector<1x32x16xf32>,
    return
  }
}

module attributes {stable_mosaic.version = 11 : i64} {
  func.func @_e2e_e2n_kernel(%arg0: i32, %arg1: memref<2x8x32xf32, #tpu.memory_space<vmem>>, %arg2: memref<2x1x512xf32, #tpu.memory_space<vmem>>, %arg3: memref<32x512xf32, #tpu.memory_space<vmem>>, %arg4: memref<512x64xf32, #tpu.memory_space<vmem>>, %arg5: memref<1x64xf32, #tpu.memory_space<vmem>>, %arg6: memref<2x8x64xf32, #tpu.memory_space<vmem>>) attributes {dimension_semantics = [#tpu.dimension_semantics<parallel>], iteration_bounds = array<i64: 2>, scalar_prefetch = 0 : i64, scratch_operands = 0 : i64, tpu.core_type = #tpu.core_type<tc>, window_params = [{transform_indices = @transform_0, window_bounds = array<i64: 2, 8, 32>}, {pipeline_mode = #tpu.pipeline_mode<synchronous>, transform_indices = @transform_1, window_bounds = array<i64: 2, 1, 512>}, {pipeline_mode = #tpu.pipeline_mode<synchronous>, transform_indices = @transform_2, window_bounds = array<i64: 32, 512>}, {pipeline_mode = #tpu.pipeline_mode<synchronous>, transform_indices = @transform_3, window_bounds = array<i64: 512, 64>}, {pipeline_mode = #tpu.pipeline_mode<synchronous>, transform_indices = @transform_4, window_bounds = array<i64: 1, 64>}, {transform_indices = @transform_5, window_bounds = array<i64: 2, 8, 64>}]} {
    %c0 = arith.constant 0 : index
    %c0_0 = arith.constant 0 : index
    %0 = vector.load %arg3[%c0, %c0_0] : memref<32x512xf32, #tpu.memory_space<vmem>>, vector<32x512xf32>
    %c0_1 = arith.constant 0 : index
    %c0_2 = arith.constant 0 : index
    %1 = vector.load %arg4[%c0_1, %c0_2] : memref<512x64xf32, #tpu.memory_space<vmem>>, vector<512x64xf32>
    %c0_3 = arith.constant 0 : index
    %c0_4 = arith.constant 0 : index
    %2 = vector.load %arg5[%c0_3, %c0_4] : memref<1x64xf32, #tpu.memory_space<vmem>>, vector<1x64xf32>
    %c0_5 = arith.constant 0 : index
    %c0_6 = arith.constant 0 : index
    %c0_7 = arith.constant 0 : index
    %3 = vector.load %arg1[%c0_5, %c0_6, %c0_7] : memref<2x8x32xf32, #tpu.memory_space<vmem>>, vector<1x8x32xf32>
    %4 = vector.shape_cast %3 : vector<1x8x32xf32> to vector<8x32xf32>
    %cst = arith.constant dense<0.000000e+00> : vector<8x512xf32>
    %5 = tpu.matmul %4, %0, %cst {dimension_numbers = #tpu.dot_dimension_numbers<[1], [0], [0], [1], [0, 0, 1, 1], [], []>} : vector<8x32xf32>, vector<32x512xf32>, vector<8x512xf32> -> vector<8x512xf32>
    %c0_8 = arith.constant 0 : index
    %c0_9 = arith.constant 0 : index
    %c0_10 = arith.constant 0 : index
    %6 = vector.load %arg2[%c0_8, %c0_9, %c0_10] : memref<2x1x512xf32, #tpu.memory_space<vmem>>, vector<1x1x512xf32>
    %7 = vector.shape_cast %6 : vector<1x1x512xf32> to vector<1x512xf32>
    %8 = vector.broadcast %7 : vector<1x512xf32> to vector<8x512xf32>
    %9 = arith.addf %5, %8 : vector<8x512xf32>
    %cst_11 = arith.constant 0.000000e+00 : f32
    %10 = vector.broadcast %cst_11 : f32 to vector<8x512xf32>
    %11 = arith.cmpf oge, %9, %10 : vector<8x512xf32>
    %cst_12 = arith.constant 3.300000e-01 : f32
    %12 = vector.broadcast %cst_12 : f32 to vector<8x512xf32>
    %13 = arith.mulf %9, %12 : vector<8x512xf32>
    %14 = arith.select %11, %9, %13 : vector<8x512xi1>, vector<8x512xf32>
    %cst_13 = arith.constant dense<0.000000e+00> : vector<8x64xf32>
    %15 = tpu.matmul %14, %1, %cst_13 {dimension_numbers = #tpu.dot_dimension_numbers<[1], [0], [0], [1], [0, 0, 1, 1], [], []>} : vector<8x512xf32>, vector<512x64xf32>, vector<8x64xf32> -> vector<8x64xf32>
    %16 = vector.broadcast %2 : vector<1x64xf32> to vector<8x64xf32>
    %17 = arith.addf %15, %16 : vector<8x64xf32>
    %cst_14 = arith.constant 0.000000e+00 : f32
    %18 = vector.broadcast %cst_14 : f32 to vector<8x64xf32>
    %19 = arith.cmpf oge, %17, %18 : vector<8x64xf32>
    %cst_15 = arith.constant 3.300000e-01 : f32
    %20 = vector.broadcast %cst_15 : f32 to vector<8x64xf32>
    %21 = arith.mulf %17, %20 : vector<8x64xf32>
    %22 = arith.select %19, %17, %21 : vector<8x64xi1>, vector<8x64xf32>
    %c0_16 = arith.constant 0 : index
    %c0_17 = arith.constant 0 : index
    %c0_18 = arith.constant 0 : index
    %23 = vector.load %arg6[%c0_16, %c0_17, %c0_18] : memref<2x8x64xf32, #tpu.memory_space<vmem>>, vector<1x8x64xf32>
    %24 = vector.shape_cast %23 : vector<1x8x64xf32> to vector<8x64xf32>
    %25 = vector.shape_cast %22 : vector<8x64xf32> to vector<1x8x64xf32>
    tpu.vector_store %arg6[%c0_16, %c0_17, %c0_18], %25 {strides = array<i32>} : memref<2x8x64xf32, #tpu.memory_space<vmem>>, vector<1x8x64xf32>,
    %c1 = arith.constant 1 : index
    %c0_19 = arith.constant 0 : index
    %c0_20 = arith.constant 0 : index
    %26 = vector.load %arg1[%c1, %c0_19, %c0_20] : memref<2x8x32xf32, #tpu.memory_space<vmem>>, vector<1x8x32xf32>
    %27 = vector.shape_cast %26 : vector<1x8x32xf32> to vector<8x32xf32>
    %cst_21 = arith.constant dense<0.000000e+00> : vector<8x512xf32>
    %28 = tpu.matmul %27, %0, %cst_21 {dimension_numbers = #tpu.dot_dimension_numbers<[1], [0], [0], [1], [0, 0, 1, 1], [], []>} : vector<8x32xf32>, vector<32x512xf32>, vector<8x512xf32> -> vector<8x512xf32>
    %c1_22 = arith.constant 1 : index
    %c0_23 = arith.constant 0 : index
    %c0_24 = arith.constant 0 : index
    %29 = vector.load %arg2[%c1_22, %c0_23, %c0_24] : memref<2x1x512xf32, #tpu.memory_space<vmem>>, vector<1x1x512xf32>
    %30 = vector.shape_cast %29 : vector<1x1x512xf32> to vector<1x512xf32>
    %31 = vector.broadcast %30 : vector<1x512xf32> to vector<8x512xf32>
    %32 = arith.addf %28, %31 : vector<8x512xf32>
    %cst_25 = arith.constant 0.000000e+00 : f32
    %33 = vector.broadcast %cst_25 : f32 to vector<8x512xf32>
    %34 = arith.cmpf oge, %32, %33 : vector<8x512xf32>
    %cst_26 = arith.constant 3.300000e-01 : f32
    %35 = vector.broadcast %cst_26 : f32 to vector<8x512xf32>
    %36 = arith.mulf %32, %35 : vector<8x512xf32>
    %37 = arith.select %34, %32, %36 : vector<8x512xi1>, vector<8x512xf32>
    %cst_27 = arith.constant dense<0.000000e+00> : vector<8x64xf32>
    %38 = tpu.matmul %37, %1, %cst_27 {dimension_numbers = #tpu.dot_dimension_numbers<[1], [0], [0], [1], [0, 0, 1, 1], [], []>} : vector<8x512xf32>, vector<512x64xf32>, vector<8x64xf32> -> vector<8x64xf32>
    %39 = vector.broadcast %2 : vector<1x64xf32> to vector<8x64xf32>
    %40 = arith.addf %38, %39 : vector<8x64xf32>
    %cst_28 = arith.constant 0.000000e+00 : f32
    %41 = vector.broadcast %cst_28 : f32 to vector<8x64xf32>
    %42 = arith.cmpf oge, %40, %41 : vector<8x64xf32>
    %cst_29 = arith.constant 3.300000e-01 : f32
    %43 = vector.broadcast %cst_29 : f32 to vector<8x64xf32>
    %44 = arith.mulf %40, %43 : vector<8x64xf32>
    %45 = arith.select %42, %40, %44 : vector<8x64xi1>, vector<8x64xf32>
    %c1_30 = arith.constant 1 : index
    %c0_31 = arith.constant 0 : index
    %c0_32 = arith.constant 0 : index
    %46 = vector.load %arg6[%c1_30, %c0_31, %c0_32] : memref<2x8x64xf32, #tpu.memory_space<vmem>>, vector<1x8x64xf32>
    %47 = vector.shape_cast %46 : vector<1x8x64xf32> to vector<8x64xf32>
    %48 = vector.shape_cast %45 : vector<8x64xf32> to vector<1x8x64xf32>
    tpu.vector_store %arg6[%c1_30, %c0_31, %c0_32], %48 {strides = array<i32>} : memref<2x8x64xf32, #tpu.memory_space<vmem>>, vector<1x8x64xf32>,
    return
  }
  func.func @transform_0(%arg0: i32) -> (i32, i32, i32) {
    %c0_i32 = arith.constant 0 : i32
    %c0_i32_0 = arith.constant 0 : i32
    %c0_i32_1 = arith.constant 0 : i32
    return %c0_i32, %arg0, %c0_i32_0 : i32, i32, i32
  }
  func.func @transform_1(%arg0: i32) -> (i32, i32, i32) {
    %c0_i32 = arith.constant 0 : i32
    %c0_i32_0 = arith.constant 0 : i32
    %c0_i32_1 = arith.constant 0 : i32
    %c0_i32_2 = arith.constant 0 : i32
    return %c0_i32, %c0_i32_0, %c0_i32_1 : i32, i32, i32
  }
  func.func @transform_2(%arg0: i32) -> (i32, i32) {
    %c0_i32 = arith.constant 0 : i32
    %c0_i32_0 = arith.constant 0 : i32
    %c0_i32_1 = arith.constant 0 : i32
    return %c0_i32, %c0_i32_0 : i32, i32
  }
  func.func @transform_3(%arg0: i32) -> (i32, i32) {
    %c0_i32 = arith.constant 0 : i32
    %c0_i32_0 = arith.constant 0 : i32
    %c0_i32_1 = arith.constant 0 : i32
    return %c0_i32, %c0_i32_0 : i32, i32
  }
  func.func @transform_4(%arg0: i32) -> (i32, i32) {
    %c0_i32 = arith.constant 0 : i32
    %c0_i32_0 = arith.constant 0 : i32
    %c0_i32_1 = arith.constant 0 : i32
    return %c0_i32, %c0_i32_0 : i32, i32
  }
  func.func @transform_5(%arg0: i32) -> (i32, i32, i32) {
    %c0_i32 = arith.constant 0 : i32
    %c0_i32_0 = arith.constant 0 : i32
    %c0_i32_1 = arith.constant 0 : i32
    return %c0_i32, %arg0, %c0_i32_0 : i32, i32, i32
  }
}

module attributes {stable_mosaic.version = 11 : i64} {
  func.func @_head_kernel(%arg0: memref<2x1024xf32, #tpu.memory_space<vmem>>, %arg1: memref<1024x128xf32, #tpu.memory_space<vmem>>, %arg2: memref<1x128xf32, #tpu.memory_space<vmem>>, %arg3: memref<128x64xf32, #tpu.memory_space<vmem>>, %arg4: memref<1x64xf32, #tpu.memory_space<vmem>>, %arg5: memref<64x2xf32, #tpu.memory_space<vmem>>, %arg6: memref<1x2xf32, #tpu.memory_space<vmem>>, %arg7: memref<2x2xf32, #tpu.memory_space<vmem>>) attributes {dimension_semantics = [], scalar_prefetch = 0 : i64, scratch_operands = 0 : i64, tpu.core_type = #tpu.core_type<tc>} {
    %c0 = arith.constant 0 : index
    %c0_0 = arith.constant 0 : index
    %0 = vector.load %arg0[%c0, %c0_0] : memref<2x1024xf32, #tpu.memory_space<vmem>>, vector<2x1024xf32>
    %c0_1 = arith.constant 0 : index
    %c0_2 = arith.constant 0 : index
    %1 = vector.load %arg1[%c0_1, %c0_2] : memref<1024x128xf32, #tpu.memory_space<vmem>>, vector<1024x128xf32>
    %cst = arith.constant dense<0.000000e+00> : vector<2x128xf32>
    %2 = tpu.matmul %0, %1, %cst {dimension_numbers = #tpu.dot_dimension_numbers<[1], [0], [0], [1], [0, 0, 1, 1], [], []>} : vector<2x1024xf32>, vector<1024x128xf32>, vector<2x128xf32> -> vector<2x128xf32>
    %c0_3 = arith.constant 0 : index
    %c0_4 = arith.constant 0 : index
    %3 = vector.load %arg2[%c0_3, %c0_4] : memref<1x128xf32, #tpu.memory_space<vmem>>, vector<1x128xf32>
    %4 = vector.broadcast %3 : vector<1x128xf32> to vector<2x128xf32>
    %5 = arith.addf %2, %4 : vector<2x128xf32>
    %cst_5 = arith.constant 0.000000e+00 : f32
    %6 = vector.broadcast %cst_5 : f32 to vector<2x128xf32>
    %7 = arith.cmpf oge, %5, %6 : vector<2x128xf32>
    %cst_6 = arith.constant 3.300000e-01 : f32
    %8 = vector.broadcast %cst_6 : f32 to vector<2x128xf32>
    %9 = arith.mulf %5, %8 : vector<2x128xf32>
    %10 = arith.select %7, %5, %9 : vector<2x128xi1>, vector<2x128xf32>
    %c0_7 = arith.constant 0 : index
    %c0_8 = arith.constant 0 : index
    %11 = vector.load %arg3[%c0_7, %c0_8] : memref<128x64xf32, #tpu.memory_space<vmem>>, vector<128x64xf32>
    %cst_9 = arith.constant dense<0.000000e+00> : vector<2x64xf32>
    %12 = tpu.matmul %10, %11, %cst_9 {dimension_numbers = #tpu.dot_dimension_numbers<[1], [0], [0], [1], [0, 0, 1, 1], [], []>} : vector<2x128xf32>, vector<128x64xf32>, vector<2x64xf32> -> vector<2x64xf32>
    %c0_10 = arith.constant 0 : index
    %c0_11 = arith.constant 0 : index
    %13 = vector.load %arg4[%c0_10, %c0_11] : memref<1x64xf32, #tpu.memory_space<vmem>>, vector<1x64xf32>
    %14 = vector.broadcast %13 : vector<1x64xf32> to vector<2x64xf32>
    %15 = arith.addf %12, %14 : vector<2x64xf32>
    %cst_12 = arith.constant 0.000000e+00 : f32
    %16 = vector.broadcast %cst_12 : f32 to vector<2x64xf32>
    %17 = arith.cmpf oge, %15, %16 : vector<2x64xf32>
    %cst_13 = arith.constant 3.300000e-01 : f32
    %18 = vector.broadcast %cst_13 : f32 to vector<2x64xf32>
    %19 = arith.mulf %15, %18 : vector<2x64xf32>
    %20 = arith.select %17, %15, %19 : vector<2x64xi1>, vector<2x64xf32>
    %c0_14 = arith.constant 0 : index
    %c0_15 = arith.constant 0 : index
    %21 = vector.load %arg5[%c0_14, %c0_15] : memref<64x2xf32, #tpu.memory_space<vmem>>, vector<64x2xf32>
    %cst_16 = arith.constant dense<0.000000e+00> : vector<2x2xf32>
    %22 = tpu.matmul %20, %21, %cst_16 {dimension_numbers = #tpu.dot_dimension_numbers<[1], [0], [0], [1], [0, 0, 1, 1], [], []>} : vector<2x64xf32>, vector<64x2xf32>, vector<2x2xf32> -> vector<2x2xf32>
    %c0_17 = arith.constant 0 : index
    %c0_18 = arith.constant 0 : index
    %23 = vector.load %arg6[%c0_17, %c0_18] : memref<1x2xf32, #tpu.memory_space<vmem>>, vector<1x2xf32>
    %24 = vector.broadcast %23 : vector<1x2xf32> to vector<2x2xf32>
    %25 = arith.addf %22, %24 : vector<2x2xf32>
    %cst_19 = arith.constant 0.000000e+00 : f32
    %26 = vector.broadcast %cst_19 : f32 to vector<2x2xf32>
    %27 = arith.cmpf oge, %25, %26 : vector<2x2xf32>
    %cst_20 = arith.constant 3.300000e-01 : f32
    %28 = vector.broadcast %cst_20 : f32 to vector<2x2xf32>
    %29 = arith.mulf %25, %28 : vector<2x2xf32>
    %30 = arith.select %27, %25, %29 : vector<2x2xi1>, vector<2x2xf32>
    %cst_21 = arith.constant dense<0xFF800000> : vector<2xf32>
    %31 = vector.multi_reduction <maximumf>, %30, %cst_21 [1] : vector<2x2xf32> to vector<2xf32>
    %32 = vector.shape_cast %31 : vector<2xf32> to vector<2x1xf32>
    %33 = vector.broadcast %32 : vector<2x1xf32> to vector<2x2xf32>
    %34 = arith.subf %30, %33 : vector<2x2xf32>
    %35 = math.exp %34 : vector<2x2xf32>
    %cst_22 = arith.constant dense<0.000000e+00> : vector<2xf32>
    %36 = vector.multi_reduction <add>, %35, %cst_22 [1] : vector<2x2xf32> to vector<2xf32>
    %37 = vector.shape_cast %36 : vector<2xf32> to vector<2x1xf32>
    %38 = math.log %37 : vector<2x1xf32>
    %39 = arith.addf %32, %38 : vector<2x1xf32>
    %40 = vector.broadcast %39 : vector<2x1xf32> to vector<2x2xf32>
    %41 = arith.subf %30, %40 : vector<2x2xf32>
    %c0_23 = arith.constant 0 : index
    %c0_24 = arith.constant 0 : index
    %42 = vector.load %arg7[%c0_23, %c0_24] : memref<2x2xf32, #tpu.memory_space<vmem>>, vector<2x2xf32>
    tpu.vector_store %arg7[%c0_23, %c0_24], %41 {strides = array<i32>} : memref<2x2xf32, #tpu.memory_space<vmem>>, vector<2x2xf32>,
    return
  }
}

</mosaic_0001>

<llo_original>
// kernel: brainnetcnn_forward.3
$region0: #{brainnetcnn_forward.3}
  #allocation0 [shape = 'u32[]', space=smem, size = 0x4, offset = 0x4, fixed_abs, tag = 'smem constant byte address 0x4 - core index']
  #allocation1 [shape = 'u32[72,128]{1,0:T(1,128)}', space=vmem, size = 0x9000, scoped, tag = 'internal scratch']
  %s0 = inlined_call_operand.vmem [shape: f32[2,1,16,16], index: 0, kind: input, shape index: {}]
  %s1 = inlined_call_operand.hbm [shape: f32[1,16,32], index: 1, kind: input, shape index: {}]
  %s2 = inlined_call_operand.vmem [shape: f32[1,32,16], index: 2, kind: input, shape index: {}]
  %s3 = inlined_call_operand.vmem [shape: f32[1,32], index: 3, kind: input, shape index: {}]
  %s4 = inlined_call_operand.vmem [shape: f32[32,1], index: 4, kind: input, shape index: {}]
  %s5 = inlined_call_operand.vmem [shape: f32[2,16,32], index: 5, kind: output, shape index: {0}]
  %s6 = inlined_call_operand.vmem [shape: f32[2,32,16], index: 6, kind: output, shape index: {1}]
  %7 = xla_tuple %s5, %s6
  %s8 = sld [smem:[#allocation0]]
  $region42: #{brainnetcnn_forward.3} parent=0
    _
  %s10 = ssub.s32 1, %s8
  %s11 = scalar_select 0, %s10, %s8
  $region1: #{brainnetcnn_forward.3} parent=0
    #allocation2 [shape = 'u8[8192]{0}', space=vmem, size = 0x2000, scoped, tag = 'input window, operand 1, single buffered']
    #allocation3 [shape = 's32[1]{0}', space=sflag, size = 0x4, scoped, tag = 'scoped memory for brainnetcnn_forward.3']
    %12 = vsyncpa [#allocation3], 0
    // Predicated region
    $region2: #{brainnetcnn_forward.3} parent=1 // pred_check
      _
    $region3: #{brainnetcnn_forward.3} parent=1 // pred_check_branch
      %14 = sbr.rel (0) target = $region5
    $region4: #{brainnetcnn_forward.3} parent=1 // pred_region
      _
    $region5: #{brainnetcnn_forward.3} parent=1 // pred_fallthru
      _
    // Predicated region
    $region6: #{brainnetcnn_forward.3} parent=1 // pred_check
      _
    $region7: #{brainnetcnn_forward.3} parent=1 // pred_check_branch
      %16 = sbr.rel (0) target = $region9
    $region8: #{brainnetcnn_forward.3} parent=1 // pred_region
      %18 = vsyncadd [#allocation3], 0
      %s19 = sshll.u32 %s1, 4
      %s20 = int_to_ptr.hbm [resolvable:$true] %s19
      %s21 = sshll.u32 [#allocation2], 4
      %s22 = int_to_ptr.vmem [resolvable:$true] %s21
      %27 = dma.hbm_to_vmem [thread:$0]  %s20, 256, %s22, [#allocation3], 128, 128, 8
    $region9: #{brainnetcnn_forward.3} parent=1 // pred_fallthru
      _
    // Predicated region
    $region10: #{brainnetcnn_forward.3} parent=1 // pred_check
      _
    $region11: #{brainnetcnn_forward.3} parent=1 // pred_check_branch
      %29 = sbr.rel (0) target = $region13
    $region12: #{brainnetcnn_forward.3} parent=1 // pred_region
      _
    $region13: #{brainnetcnn_forward.3} parent=1 // pred_fallthru
      _
    // Predicated region
    $region14: #{brainnetcnn_forward.3} parent=1 // pred_check
      _
    $region15: #{brainnetcnn_forward.3} parent=1 // pred_check_branch
      %31 = sbr.rel (0) target = $region17
    $region16: #{brainnetcnn_forward.3} parent=1 // pred_region
      _
    $region17: #{brainnetcnn_forward.3} parent=1 // pred_fallthru
      _
    // Predicated region
    $region18: #{brainnetcnn_forward.3} parent=1 // pred_check
      _
    $region19: #{brainnetcnn_forward.3} parent=1 // pred_check_branch
      %33 = sbr.rel (0) target = $region21
    $region20: #{brainnetcnn_forward.3} parent=1 // pred_region
      _
    $region21: #{brainnetcnn_forward.3} parent=1 // pred_fallthru
      _
    // Predicated region
    $region22: #{brainnetcnn_forward.3} parent=1 // pred_check
      _
    $region23: #{brainnetcnn_forward.3} parent=1 // pred_check_branch
      %35 = sbr.rel (0) target = $region25
    $region24: #{brainnetcnn_forward.3} parent=1 // pred_region
      %37 = dma.done [#allocation3], 256
    $region25: #{brainnetcnn_forward.3} parent=1 // pred_fallthru
      _
    %v38 = vld [vmem:[%s3] sm:$0x1]
    %v39 = vld [vmem:[%s4] sm:$0xff]
    %v40 = vld [vmem:[%s4 + $0x8] sm:$0xff]
    %v41 = vld [vmem:[%s4 + $0x10] sm:$0xff]
    %v42 = vld [vmem:[%s4 + $0x18] sm:$0xff]
    %v43 = vld [vmem:[%s0] sm:$0xff]
    %v44 = vld [vmem:[%s0 + $0x8] sm:$0xff]
    %v45 = vld [vmem:[#allocation2] sm:$0xff]
    %v46 = vld [vmem:[#allocation2 + $0x8] sm:$0xff]
    %v47 = vld [vmem:[%s2] sm:$0xff]
    %v48 = vld [vmem:[%s2 + $0x8] sm:$0xff]
    %v49 = vld [vmem:[%s2 + $0x10] sm:$0xff]
    %v50 = vld [vmem:[%s2 + $0x18] sm:$0xff]
    %v52 = vperm.slane %v38, 0
    %vm54 = vcmask 130048
    %v56 = vsel %vm54, %v43, 0
    %v59 = vsel %vm54, %v44, 0
    %61 = vmatpush.msra.mxu0 0.0
    %62 = vmatpush.msra.mxu0 0.0
    %63 = vmatpush.msra.mxu0 0.0
    %64 = vmatpush.msra.mxu0 0.0
    %65 = vmatpush.msra.mxu0 0.0
    %66 = vmatpush.msra.mxu0 0.0
    %67 = vmatpush.msra.mxu0 0.0
    %68 = vmatpush.msra.mxu0 0.0
    %69 = vmatpush.msra.mxu0 0.0
    %70 = vmatpush.msra.mxu0 0.0
    %71 = vmatpush.msra.mxu0 0.0
    %72 = vmatpush.msra.mxu0 0.0
    %73 = vmatpush.msra.mxu0 0.0
    %74 = vmatpush.msra.mxu0 0.0
    %75 = vmatpush.msra.mxu0 %v46
    %76 = vmatpush.msra.mxu0 %v45
    %77 = vmatmul.f32.gmra.mxu0 %v56
    %v78 = vpop.f32.mrf.mxu0
    %v79 = vadd.f32 %v52, %v78
    %80 = vmatmul.f32.gmra.mxu0 %v59
    %v81 = vpop.f32.mrf.mxu0
    %v82 = vadd.f32 %v52, %v81
    %83 = vdwg.mxu0
    %vm84 = vcmask 261120
    %85 = vst.msk [vmem:[%s5] sm:$0xff] %vm84, %v79
    %86 = vst.msk [vmem:[%s5 + $0x8] sm:$0xff] %vm84, %v82
    %88 = vset.pattern.permute.xlu0 0
    %89 = vperm.xlu0 %88, %v39
    %v90 = vpop.permute.xlu0 %89
    %93 = vset.pattern.permute.xlu0 0
    %94 = vperm.xlu0 %93, %v40
    %v95 = vpop.permute.xlu0 %94
    %98 = vset.pattern.permute.xlu0 0
    %99 = vperm.xlu0 %98, %v41
    %v100 = vpop.permute.xlu0 %99
    %103 = vset.pattern.permute.xlu0 0
    %104 = vperm.xlu0 %103, %v42
    %v105 = vpop.permute.xlu0 %104
    %v108 = vsel %vm54, %v47, 0
    %v111 = vsel %vm54, %v48, 0
    %v114 = vsel %vm54, %v49, 0
    %v117 = vsel %vm54, %v50, 0
    %119 = vmatpush.msra.mxu0 0.0
    %120 = vmatpush.msra.mxu0 0.0
    %121 = vmatpush.msra.mxu0 0.0
    %122 = vmatpush.msra.mxu0 0.0
    %123 = vmatpush.msra.mxu0 0.0
    %124 = vmatpush.msra.mxu0 0.0
    %125 = vmatpush.msra.mxu0 0.0
    %126 = vmatpush.msra.mxu0 0.0
    %127 = vmatpush.msra.mxu0 0.0
    %128 = vmatpush.msra.mxu0 0.0
    %129 = vmatpush.msra.mxu0 0.0
    %130 = vmatpush.msra.mxu0 0.0
    %131 = vmatpush.msra.mxu0 0.0
    %132 = vmatpush.msra.mxu0 0.0
    %133 = vmatpush.msra.mxu0 %v44
    %134 = vmatpush.msra.mxu0 %v43
    %135 = vmatmul.f32.gmra.mxu0 %v108
    %v136 = vpop.f32.mrf.mxu0
    %v137 = vadd.f32 %v90, %v136
    %138 = vmatmul.f32.gmra.mxu0 %v111
    %v139 = vpop.f32.mrf.mxu0
    %v140 = vadd.f32 %v95, %v139
    %141 = vmatmul.f32.gmra.mxu0 %v114
    %v142 = vpop.f32.mrf.mxu0
    %v143 = vadd.f32 %v100, %v142
    %144 = vmatmul.f32.gmra.mxu0 %v117
    %v145 = vpop.f32.mrf.mxu0
    %v146 = vadd.f32 %v105, %v145
    %147 = vdwg.mxu0
    %148 = vst.msk [vmem:[%s6] sm:$0xff] %vm54, %v137
    %149 = vst.msk [vmem:[%s6 + $0x8] sm:$0xff] %vm54, %v140
    %150 = vst.msk [vmem:[%s6 + $0x10] sm:$0xff] %vm54, %v143
    %151 = vst.msk [vmem:[%s6 + $0x18] sm:$0xff] %vm54, %v146
    %s152 = scalar_lea.vmem %s0, 16
    %v153 = vld [vmem:[%s152] sm:$0xff]
    %v154 = vld [vmem:[%s152 + $0x8] sm:$0xff]
    %v155 = vld [vmem:[#allocation2] sm:$0xff]
    %v156 = vld [vmem:[#allocation2 + $0x8] sm:$0xff]
    %v157 = vld [vmem:[%s2] sm:$0xff]
    %v158 = vld [vmem:[%s2 + $0x8] sm:$0xff]
    %v159 = vld [vmem:[%s2 + $0x10] sm:$0xff]
    %v160 = vld [vmem:[%s2 + $0x18] sm:$0xff]
    %v162 = vsel %vm54, %v153, 0
    %v165 = vsel %vm54, %v154, 0
    %167 = vmatpush.msra.mxu0 0.0
    %168 = vmatpush.msra.mxu0 0.0
    %169 = vmatpush.msra.mxu0 0.0
    %170 = vmatpush.msra.mxu0 0.0
    %171 = vmatpush.msra.mxu0 0.0
    %172 = vmatpush.msra.mxu0 0.0
    %173 = vmatpush.msra.mxu0 0.0
    %174 = vmatpush.msra.mxu0 0.0
    %175 = vmatpush.msra.mxu0 0.0
    %176 = vmatpush.msra.mxu0 0.0
    %177 = vmatpush.msra.mxu0 0.0
    %178 = vmatpush.msra.mxu0 0.0
    %179 = vmatpush.msra.mxu0 0.0
    %180 = vmatpush.msra.mxu0 0.0
    %181 = vmatpush.msra.mxu0 %v156
    %182 = vmatpush.msra.mxu0 %v155
    %183 = vmatmul.f32.gmra.mxu0 %v162
    %v184 = vpop.f32.mrf.mxu0
    %v185 = vadd.f32 %v52, %v184
    %186 = vmatmul.f32.gmra.mxu0 %v165
    %v187 = vpop.f32.mrf.mxu0
    %v188 = vadd.f32 %v52, %v187
    %189 = vdwg.mxu0
    %s190 = scalar_lea.vmem %s5, 16
    %191 = vst.msk [vmem:[%s190] sm:$0xff] %vm84, %v185
    %192 = vst.msk [vmem:[%s190 + $0x8] sm:$0xff] %vm84, %v188
    %v194 = vsel %vm54, %v157, 0
    %v197 = vsel %vm54, %v158, 0
    %v200 = vsel %vm54, %v159, 0
    %v203 = vsel %vm54, %v160, 0
    %205 = vmatpush.msra.mxu0 0.0
    %206 = vmatpush.msra.mxu0 0.0
    %207 = vmatpush.msra.mxu0 0.0
    %208 = vmatpush.msra.mxu0 0.0
    %209 = vmatpush.msra.mxu0 0.0
    %210 = vmatpush.msra.mxu0 0.0
    %211 = vmatpush.msra.mxu0 0.0
    %212 = vmatpush.msra.mxu0 0.0
    %213 = vmatpush.msra.mxu0 0.0
    %214 = vmatpush.msra.mxu0 0.0
    %215 = vmatpush.msra.mxu0 0.0
    %216 = vmatpush.msra.mxu0 0.0
    %217 = vmatpush.msra.mxu0 0.0
    %218 = vmatpush.msra.mxu0 0.0
    %219 = vmatpush.msra.mxu0 %v154
    %220 = vmatpush.msra.mxu0 %v153
    %221 = vmatmul.f32.gmra.mxu0 %v194
    %v222 = vpop.f32.mrf.mxu0
    %v223 = vadd.f32 %v90, %v222
    %224 = vmatmul.f32.gmra.mxu0 %v197
    %v225 = vpop.f32.mrf.mxu0
    %v226 = vadd.f32 %v95, %v225
    %227 = vmatmul.f32.gmra.mxu0 %v200
    %v228 = vpop.f32.mrf.mxu0
    %v229 = vadd.f32 %v100, %v228
    %230 = vmatmul.f32.gmra.mxu0 %v203
    %v231 = vpop.f32.mrf.mxu0
    %v232 = vadd.f32 %v105, %v231
    %233 = vdwg.mxu0
    %s234 = scalar_lea.vmem %s6, 32
    %235 = vst.msk [vmem:[%s234] sm:$0xff] %vm54, %v223
    %236 = vst.msk [vmem:[%s234 + $0x8] sm:$0xff] %vm54, %v226
    %237 = vst.msk [vmem:[%s234 + $0x10] sm:$0xff] %vm54, %v229
    %238 = vst.msk [vmem:[%s234 + $0x18] sm:$0xff] %vm54, %v232
    // Predicated region
    $region26: #{brainnetcnn_forward.3} parent=1 // pred_check
      _
    $region27: #{brainnetcnn_forward.3} parent=1 // pred_check_branch
      %240 = sbr.rel (0) target = $region29
    $region28: #{brainnetcnn_forward.3} parent=1 // pred_region
      _
    $region29: #{brainnetcnn_forward.3} parent=1 // pred_fallthru
      _
    // Predicated region
    $region30: #{brainnetcnn_forward.3} parent=1 // pred_check
      _
    $region31: #{brainnetcnn_forward.3} parent=1 // pred_check_branch
      %242 = sbr.rel (0) target = $region33
    $region32: #{brainnetcnn_forward.3} parent=1 // pred_region
      _
    $region33: #{brainnetcnn_forward.3} parent=1 // pred_fallthru
      _
    // Predicated region
    $region34: #{brainnetcnn_forward.3} parent=1 // pred_check
      _
    $region35: #{brainnetcnn_forward.3} parent=1 // pred_check_branch
      %244 = sbr.rel (0) target = $region37
    $region36: #{brainnetcnn_forward.3} parent=1 // pred_region
      _
    $region37: #{brainnetcnn_forward.3} parent=1 // pred_fallthru
      _
    // Predicated region
    $region38: #{brainnetcnn_forward.3} parent=1 // pred_check
      _
    $region39: #{brainnetcnn_forward.3} parent=1 // pred_check_branch
      %246 = sbr.rel (0) target = $region41
    $region40: #{brainnetcnn_forward.3} parent=1 // pred_region
      _
    $region41: #{brainnetcnn_forward.3} parent=1 // pred_fallthru
      _
    %247 = vsyncpa [#allocation3], 1

// kernel: brainnetcnn_forward.4
$region0: #{brainnetcnn_forward.4}
  #allocation0 [shape = 'u32[]', space=smem, size = 0x4, offset = 0x4, fixed_abs, tag = 'smem constant byte address 0x4 - core index']
  #allocation1 [shape = 'u32[72,128]{1,0:T(1,128)}', space=vmem, size = 0x9000, scoped, tag = 'internal scratch']
  %s0 = inlined_call_operand.vmem [shape: f32[2,16,32], index: 0, kind: input, shape index: {}]
  %s1 = inlined_call_operand.vmem [shape: f32[2,1,512], index: 1, kind: input, shape index: {}]
  %s2 = inlined_call_operand.vmem [shape: f32[32,512], index: 2, kind: input, shape index: {}]
  %s3 = inlined_call_operand.hbm [shape: f32[512,64], index: 3, kind: input, shape index: {}]
  %s4 = inlined_call_operand.vmem [shape: f32[1,64], index: 4, kind: input, shape index: {}]
  %s5 = inlined_call_operand.vmem [shape: f32[2,16,64], index: 5, kind: output, shape index: {}]
  %s6 = sld [smem:[#allocation0]]
  $region129: #{brainnetcnn_forward.4} parent=0
    _
  %s8 = ssub.s32 1, %s6
  %s9 = scalar_select 0, %s8, %s6
  $region1: #{brainnetcnn_forward.4} parent=0
    #allocation2 [shape = 'u8[16384]{0}', space=vmem, size = 0x4000, scoped, tag = 'input window, operand 0']
    #allocation3 [shape = 'u8[262144]{0}', space=vmem, size = 0x40000, scoped, tag = 'input window, operand 3, single buffered']
    #allocation4 [shape = 's32[2]{0}', space=sflag, size = 0x8, scoped, tag = 'scoped memory for brainnetcnn_forward.4']
    #allocation5 [shape = 'u8[16384]{0}', space=vmem, size = 0x4000, scoped, tag = 'output window, operand 0']
    %10 = vsyncpa [#allocation4], 0
    loop: start=0, step=1, limit=4
    $region2: #{brainnetcnn_forward.4} parent=1 // loop_pre_header
      _
    $region3: #{brainnetcnn_forward.4} parent=1 // loop_header
      %s12 = sphi 0, %s16
      %p13 = scmp.ge.s32.totalorder %s12, 4
      %s22 = sphi 0, %s24
      %s25 = sphi 0, %s22
      %s26 = sphi 0, %s25
      %s42 = sphi 0, %s26
      %s46 = sphi 0, %s46
      %s48 = sphi 0, %s46
      %s49 = sphi 0, %s48
      %s63 = sphi 0, %s49
      %s67 = sphi 0, %s67
      %s69 = sphi 0, %s67
      %s70 = sphi 0, %s69
      %s84 = sphi 0, %s70
      %s88 = sphi 0, %s88
      %s90 = sphi 0, %s88
      %s91 = sphi 0, %s90
      %s105 = sphi 0, %s91
      %s109 = sphi 0, %s109
      %s111 = sphi 0, %s109
      %s112 = sphi 0, %s111
      %s126 = sphi 0, %s112
      %s132 = sphi 0, %s134
      %s135 = sphi 0, %s132
      %s136 = sphi 0, %s135
      %s152 = sphi 0, %s136
    $region4: #{brainnetcnn_forward.4} parent=1 // loop_header_branch
      %15 = sbr.rel (%p13) target = $region8
    $region5: #{brainnetcnn_forward.4} parent=1 // loop_body
      %s17 = ssub.s32 %s12, 1
      %s18 = ssub.s32 %s12, 2
      %s19 = sadd.s32 %s12, 1
      %s20 = ssub.s32 %s12, %s19
      %p21 = scmp.eq.s32.totalorder %s20, 0
      %s23 = sadd.s32 %s22, 1
      %s24 = scalar_select %p21, %s22, %s23
      %p27 = pneg %p21
      %p28 = scmp.eq.s32.totalorder %s12, 1
      %p29 = por %p27, %p28
      %p30 = scmp.ne.s32.totalorder %s22, %s25
      %p31 = scmp.eq.s32.totalorder %s12, 0
      %p32 = por %p30, %p31
      %p33 = scmp.ne.s32.totalorder %s22, %s25
      %p34 = scmp.eq.s32.totalorder %s17, 1
      %p35 = por %p33, %p34
      %p36 = scmp.ne.s32.totalorder %s25, %s26
      %p37 = scmp.eq.s32.totalorder %s17, 0
      %p38 = por %p36, %p37
      %p39 = scmp.ne.s32.totalorder %s25, %s26
      %p40 = scmp.eq.s32.totalorder %s18, 1
      %p41 = por %p39, %p40
      %p43 = scmp.ne.s32.totalorder %s26, %s42
      %p44 = scmp.eq.s32.totalorder %s18, 0
      %p45 = por %p43, %p44
      %s47 = sadd.s32 %s46, 1
      %p50 = scmp.eq.s32.totalorder %s12, 1
      %p51 = scmp.ne.s32.totalorder %s46, %s48
      %p52 = scmp.eq.s32.totalorder %s12, 0
      %p53 = por %p51, %p52
      %p54 = scmp.ne.s32.totalorder %s46, %s48
      %p55 = scmp.eq.s32.totalorder %s17, 1
      %p56 = por %p54, %p55
      %p57 = scmp.ne.s32.totalorder %s48, %s49
      %p58 = scmp.eq.s32.totalorder %s17, 0
      %p59 = por %p57, %p58
      %p60 = scmp.ne.s32.totalorder %s48, %s49
      %p61 = scmp.eq.s32.totalorder %s18, 1
      %p62 = por %p60, %p61
      %p64 = scmp.ne.s32.totalorder %s49, %s63
      %p65 = scmp.eq.s32.totalorder %s18, 0
      %p66 = por %p64, %p65
      %s68 = sadd.s32 %s67, 1
      %p71 = scmp.eq.s32.totalorder %s12, 1
      %p72 = scmp.ne.s32.totalorder %s67, %s69
      %p73 = scmp.eq.s32.totalorder %s12, 0
      %p74 = por %p72, %p73
      %p75 = scmp.ne.s32.totalorder %s67, %s69
      %p76 = scmp.eq.s32.totalorder %s17, 1
      %p77 = por %p75, %p76
      %p78 = scmp.ne.s32.totalorder %s69, %s70
      %p79 = scmp.eq.s32.totalorder %s17, 0
      %p80 = por %p78, %p79
      %p81 = scmp.ne.s32.totalorder %s69, %s70
      %p82 = scmp.eq.s32.totalorder %s18, 1
      %p83 = por %p81, %p82
      %p85 = scmp.ne.s32.totalorder %s70, %s84
      %p86 = scmp.eq.s32.totalorder %s18, 0
      %p87 = por %p85, %p86
      %s89 = sadd.s32 %s88, 1
      %p92 = scmp.eq.s32.totalorder %s12, 1
      %p93 = scmp.ne.s32.totalorder %s88, %s90
      %p94 = scmp.eq.s32.totalorder %s12, 0
      %p95 = por %p93, %p94
      %p96 = scmp.ne.s32.totalorder %s88, %s90
      %p97 = scmp.eq.s32.totalorder %s17, 1
      %p98 = por %p96, %p97
      %p99 = scmp.ne.s32.totalorder %s90, %s91
      %p100 = scmp.eq.s32.totalorder %s17, 0
      %p101 = por %p99, %p100
      %p102 = scmp.ne.s32.totalorder %s90, %s91
      %p103 = scmp.eq.s32.totalorder %s18, 1
      %p104 = por %p102, %p103
      %p106 = scmp.ne.s32.totalorder %s91, %s105
      %p107 = scmp.eq.s32.totalorder %s18, 0
      %p108 = por %p106, %p107
      %s110 = sadd.s32 %s109, 1
      %p113 = scmp.eq.s32.totalorder %s12, 1
      %p114 = scmp.ne.s32.totalorder %s109, %s111
      %p115 = scmp.eq.s32.totalorder %s12, 0
      %p116 = por %p114, %p115
      %p117 = scmp.ne.s32.totalorder %s109, %s111
      %p118 = scmp.eq.s32.totalorder %s17, 1
      %p119 = por %p117, %p118
      %p120 = scmp.ne.s32.totalorder %s111, %s112
      %p121 = scmp.eq.s32.totalorder %s17, 0
      %p122 = por %p120, %p121
      %p123 = scmp.ne.s32.totalorder %s111, %s112
      %p124 = scmp.eq.s32.totalorder %s18, 1
      %p125 = por %p123, %p124
      %p127 = scmp.ne.s32.totalorder %s112, %s126
      %p128 = scmp.eq.s32.totalorder %s18, 0
      %p129 = por %p127, %p128
      %s130 = ssub.s32 %s12, %s19
      %p131 = scmp.eq.s32.totalorder %s130, 0
      %s133 = sadd.s32 %s132, 1
      %s134 = scalar_select %p131, %s132, %s133
      %p137 = pneg %p131
      %p138 = scmp.eq.s32.totalorder %s12, 1
      %p139 = por %p137, %p138
      %p140 = scmp.ne.s32.totalorder %s132, %s135
      %p141 = scmp.eq.s32.totalorder %s12, 0
      %p142 = por %p140, %p141
      %p143 = scmp.ne.s32.totalorder %s132, %s135
      %p144 = scmp.eq.s32.totalorder %s17, 1
      %p145 = por %p143, %p144
      %p146 = scmp.ne.s32.totalorder %s135, %s136
      %p147 = scmp.eq.s32.totalorder %s17, 0
      %p148 = por %p146, %p147
      %p149 = scmp.ne.s32.totalorder %s135, %s136
      %p150 = scmp.eq.s32.totalorder %s18, 1
      %p151 = por %p149, %p150
      %p153 = scmp.ne.s32.totalorder %s136, %s152
      %p154 = scmp.eq.s32.totalorder %s18, 0
      %p155 = por %p153, %p154
      %p156 = scmp.le.s32.totalorder 1, %s12
      %p157 = scmp.lt.s32.totalorder %s12, 3
      %p158 = pnand %p156, %p157
      %p159 = pneg %p158
      // Predicated region
      $region9: #{brainnetcnn_forward.4} parent=5 // pred_check
        _
      $region10: #{brainnetcnn_forward.4} parent=5 // pred_check_branch
        %161 = sbr.rel (%p158) target = $region12
      $region11: #{brainnetcnn_forward.4} parent=5 // pred_region
        %s162 = ssub.s32 %s12, 1
        // Predicated region
        $region13: #{brainnetcnn_forward.4} parent=11 // pred_check
          %p163 = pneg %p59
        $region14: #{brainnetcnn_forward.4} parent=11 // pred_check_branch
          %165 = sbr.rel (%p163) target = $region16
        $region15: #{brainnetcnn_forward.4} parent=11 // pred_region
          _
        $region16: #{brainnetcnn_forward.4} parent=11 // pred_fallthru
          _
        // Predicated region
        $region17: #{brainnetcnn_forward.4} parent=11 // pred_check
          %p166 = pneg %p80
        $region18: #{brainnetcnn_forward.4} parent=11 // pred_check_branch
          %168 = sbr.rel (%p166) target = $region20
        $region19: #{brainnetcnn_forward.4} parent=11 // pred_region
          _
        $region20: #{brainnetcnn_forward.4} parent=11 // pred_fallthru
          _
        // Predicated region
        $region21: #{brainnetcnn_forward.4} parent=11 // pred_check
          %p169 = pneg %p101
        $region22: #{brainnetcnn_forward.4} parent=11 // pred_check_branch
          %171 = sbr.rel (%p169) target = $region24
        $region23: #{brainnetcnn_forward.4} parent=11 // pred_region
          %173 = vsyncadd [#allocation4], 0
          %s174 = sshll.u32 %s3, 4
          %s175 = int_to_ptr.hbm [resolvable:$true] %s174
          %s176 = sshll.u32 [#allocation3], 4
          %s177 = int_to_ptr.vmem [resolvable:$true] %s176
          %182 = dma.hbm_to_vmem [thread:$0]  %s175, 8192, %s177, [#allocation4], 128, 128, 8
        $region24: #{brainnetcnn_forward.4} parent=11 // pred_fallthru
          _
        // Predicated region
        $region25: #{brainnetcnn_forward.4} parent=11 // pred_check
          %p183 = pneg %p122
        $region26: #{brainnetcnn_forward.4} parent=11 // pred_check_branch
          %185 = sbr.rel (%p183) target = $region28
        $region27: #{brainnetcnn_forward.4} parent=11 // pred_region
          _
        $region28: #{brainnetcnn_forward.4} parent=11 // pred_fallthru
          _
      $region12: #{brainnetcnn_forward.4} parent=5 // pred_fallthru
        _
      %p186 = scmp.lt.s32.totalorder %s12, 2
      // Predicated region
      $region29: #{brainnetcnn_forward.4} parent=5 // pred_check
        %p187 = pneg %p186
      $region30: #{brainnetcnn_forward.4} parent=5 // pred_check_branch
        %189 = sbr.rel (%p187) target = $region32
      $region31: #{brainnetcnn_forward.4} parent=5 // pred_region
        // Predicated region
        $region33: #{brainnetcnn_forward.4} parent=31 // pred_check
          %p190 = pneg %p32
        $region34: #{brainnetcnn_forward.4} parent=31 // pred_check_branch
          %192 = sbr.rel (%p190) target = $region36
        $region35: #{brainnetcnn_forward.4} parent=31 // pred_region
          %s193 = sand.u32 %s22, 1
          %s194 = sand.u32 %s22, 1
          %s195 = smul.addr %s194, 16
          %s196 = scalar_lea.vmem [#allocation2], %s195
          %s197 = smul.addr %s12, 8
          %s198 = scalar_lea.vmem %s0, %s197
          // Predicated region
          $region37: #{brainnetcnn_forward.4} parent=35 // pred_check
            _
          $region38: #{brainnetcnn_forward.4} parent=35 // pred_check_branch
            %200 = sbr.rel (0) target = $region40
          $region39: #{brainnetcnn_forward.4} parent=35 // pred_region
            // Predicated region
            $region41: #{brainnetcnn_forward.4} parent=39 // pred_check
              _
            $region42: #{brainnetcnn_forward.4} parent=39 // pred_check_branch
              %202 = sbr.rel (0) target = $region44
            $region43: #{brainnetcnn_forward.4} parent=39 // pred_region
              // Predicated region
              $region56: #{brainnetcnn_forward.4} parent=43 // pred_check
                _
              $region57: #{brainnetcnn_forward.4} parent=43 // pred_check_branch
                %220 = sbr.rel (0) target = $region59
              $region58: #{brainnetcnn_forward.4} parent=43 // pred_region
                loop: start=0, step=1, limit=1
                $region60: #{brainnetcnn_forward.4} parent=58 // loop_pre_header
                  _
                $region61: #{brainnetcnn_forward.4} parent=58 // loop_header
                  %s222 = sphi 0, %s226
                  %p223 = scmp.ge.s32.totalorder %s222, 1
                  %s227 = sphi %s198, %s198
                  %s228 = sphi %s196, %s196
                $region62: #{brainnetcnn_forward.4} parent=58 // loop_header_branch
                  %225 = sbr.rel (%p223) target = $region66
                $region63: #{brainnetcnn_forward.4} parent=58 // loop_body
                  %v229 = vld [vmem:[%s227] sm:$0xff]
                  %230 = vst [vmem:[%s228] sm:$0xff] %v229
                  %v231 = vld [vmem:[%s227 + $0x10] sm:$0xff]
                  %232 = vst [vmem:[%s228 + $0x8] sm:$0xff] %v231
                $region64: #{brainnetcnn_forward.4} parent=58 // loop_footer
                  %s226 = sadd.s32 1, %s222
                $region65: #{brainnetcnn_forward.4} parent=58 // loop_footer_branch
                  %221 = sbr.rel target = $region61
                $region66: #{brainnetcnn_forward.4} parent=58 // loop_exit
                  _
              $region59: #{brainnetcnn_forward.4} parent=43 // pred_fallthru
                _
              // Predicated region
              $region67: #{brainnetcnn_forward.4} parent=43 // pred_check
                _
              $region68: #{brainnetcnn_forward.4} parent=43 // pred_check_branch
                %234 = sbr.rel target = $region70
              $region69: #{brainnetcnn_forward.4} parent=43 // pred_region
                _
              $region70: #{brainnetcnn_forward.4} parent=43 // pred_fallthru
                _
            $region44: #{brainnetcnn_forward.4} parent=39 // pred_fallthru
              _
            // Predicated region
            $region45: #{brainnetcnn_forward.4} parent=39 // pred_check
              _
            $region46: #{brainnetcnn_forward.4} parent=39 // pred_check_branch
              %204 = sbr.rel target = $region48
            $region47: #{brainnetcnn_forward.4} parent=39 // pred_region
              %s206 = ssub.s32 256, 1
              loop: start=0, step=1, limit=1
              $region49: #{brainnetcnn_forward.4} parent=47 // loop_pre_header
                _
              $region50: #{brainnetcnn_forward.4} parent=47 // loop_header
                %s208 = sphi 0, %s212
                %p209 = scmp.ge.s32.totalorder %s208, 1
                %s213 = sphi %s198, %s198
                %s214 = sphi %s196, %s196
              $region51: #{brainnetcnn_forward.4} parent=47 // loop_header_branch
                %211 = sbr.rel (%p209) target = $region55
              $region52: #{brainnetcnn_forward.4} parent=47 // loop_body
                %v215 = vld [vmem:[%s213] sm:%s206]
                %216 = vst [vmem:[%s214] sm:%s206] %v215
                %v217 = vld [vmem:[%s213 + $0x10] sm:%s206]
                %218 = vst [vmem:[%s214 + $0x8] sm:%s206] %v217
              $region53: #{brainnetcnn_forward.4} parent=47 // loop_footer
                %s212 = sadd.s32 1, %s208
              $region54: #{brainnetcnn_forward.4} parent=47 // loop_footer_branch
                %207 = sbr.rel target = $region50
              $region55: #{brainnetcnn_forward.4} parent=47 // loop_exit
                _
            $region48: #{brainnetcnn_forward.4} parent=39 // pred_fallthru
              _
          $region40: #{brainnetcnn_forward.4} parent=35 // pred_fallthru
            _
          %235 = vnop
        $region36: #{brainnetcnn_forward.4} parent=31 // pred_fallthru
          _
      $region32: #{brainnetcnn_forward.4} parent=5 // pred_fallthru
        _
      %p236 = scmp.le.s32.totalorder 1, %s12
      %p237 = scmp.lt.s32.totalorder %s12, 3
      %p238 = pnand %p236, %p237
      %p239 = pneg %p238
      // Predicated region
      $region71: #{brainnetcnn_forward.4} parent=5 // pred_check
        _
      $region72: #{brainnetcnn_forward.4} parent=5 // pred_check_branch
        %241 = sbr.rel (%p238) target = $region74
      $region73: #{brainnetcnn_forward.4} parent=5 // pred_region
        %s242 = ssub.s32 %s12, 1
        %s243 = sand.u32 %s25, 1
        %s244 = sand.u32 %s25, 1
        %s245 = smul.addr %s244, 16
        %s246 = scalar_lea.vmem [#allocation2], %s245
        // Predicated region
        $region75: #{brainnetcnn_forward.4} parent=73 // pred_check
          %p247 = pneg %p38
        $region76: #{brainnetcnn_forward.4} parent=73 // pred_check_branch
          %249 = sbr.rel (%p247) target = $region78
        $region77: #{brainnetcnn_forward.4} parent=73 // pred_region
          _
        $region78: #{brainnetcnn_forward.4} parent=73 // pred_fallthru
          _
        // Predicated region
        $region79: #{brainnetcnn_forward.4} parent=73 // pred_check
          %p250 = pneg %p101
        $region80: #{brainnetcnn_forward.4} parent=73 // pred_check_branch
          %252 = sbr.rel (%p250) target = $region82
        $region81: #{brainnetcnn_forward.4} parent=73 // pred_region
          %254 = dma.done [#allocation4], 8192
        $region82: #{brainnetcnn_forward.4} parent=73 // pred_fallthru
          _
        %s255 = sand.u32 %s25, 1
        %s256 = sand.u32 %s25, 1
        %s257 = smul.addr %s256, 16
        %s258 = scalar_lea.vmem [#allocation2], %s257
        %p259 = pneg %p38
        %p260 = pneg %p35
        %p261 = pneg %p59
        %p262 = pneg %p56
        %p263 = pneg %p80
        %p264 = pneg %p77
        %p265 = pneg %p101
        %p266 = pneg %p98
        %p267 = pneg %p122
        %p268 = pneg %p119
        %p269 = pneg %p148
        %p270 = pneg %p145
        %s271 = sand.u32 %s135, 1
        %s272 = sand.u32 %s135, 1
        %s273 = smul.addr %s272, 16
        %s274 = scalar_lea.vmem [#allocation5], %s273
        %v275 = vld [vmem:[%s2] sm:$0xff]
        %v276 = vld [vmem:[%s2 + $0x8] sm:$0xff]
        %v277 = vld [vmem:[%s2 + $0x10] sm:$0xff]
        %v278 = vld [vmem:[%s2 + $0x18] sm:$0xff]
        %v279 = vld [vmem:[%s2 + $0x20] sm:$0xff]
        %v280 = vld [vmem:[%s2 + $0x28] sm:$0xff]
        %v281 = vld [vmem:[%s2 + $0x30] sm:$0xff]
        %v282 = vld [vmem:[%s2 + $0x38] sm:$0xff]
        %v283 = vld [vmem:[%s2 + $0x40] sm:$0xff]
        %v284 = vld [vmem:[%s2 + $0x48] sm:$0xff]
        %v285 = vld [vmem:[%s2 + $0x50] sm:$0xff]
        %v286 = vld [vmem:[%s2 + $0x58] sm:$0xff]
        %v287 = vld [vmem:[%s2 + $0x60] sm:$0xff]
        %v288 = vld [vmem:[%s2 + $0x68] sm:$0xff]
        %v289 = vld [vmem:[%s2 + $0x70] sm:$0xff]
        %v290 = vld [vmem:[%s2 + $0x78] sm:$0xff]
        %v291 = vld [vmem:[#allocation3] sm:$0xff]
        %v292 = vld [vmem:[#allocation3 + $0x8] sm:$0xff]
        %v293 = vld [vmem:[#allocation3 + $0x10] sm:$0xff]
        %v294 = vld [vmem:[#allocation3 + $0x18] sm:$0xff]
        %v295 = vld [vmem:[#allocation3 + $0x20] sm:$0xff]
        %v296 = vld [vmem:[#allocation3 + $0x28] sm:$0xff]
        %v297 = vld [vmem:[#allocation3 + $0x30] sm:$0xff]
        %v298 = vld [vmem:[#allocation3 + $0x38] sm:$0xff]
        %v299 = vld [vmem:[#allocation3 + $0x40] sm:$0xff]
        %v300 = vld [vmem:[#allocation3 + $0x48] sm:$0xff]
        %v301 = vld [vmem:[#allocation3 + $0x50] sm:$0xff]
        %v302 = vld [vmem:[#allocation3 + $0x58] sm:$0xff]
        %v303 = vld [vmem:[#allocation3 + $0x60] sm:$0xff]
        %v304 = vld [vmem:[#allocation3 + $0x68] sm:$0xff]
        %v305 = vld [vmem:[#allocation3 + $0x70] sm:$0xff]
        %v306 = vld [vmem:[#allocation3 + $0x78] sm:$0xff]
        %v307 = vld [vmem:[#allocation3 + $0x80] sm:$0xff]
        %v308 = vld [vmem:[#allocation3 + $0x88] sm:$0xff]
        %v309 = vld [vmem:[#allocation3 + $0x90] sm:$0xff]
        %v310 = vld [vmem:[#allocation3 + $0x98] sm:$0xff]
        %v311 = vld [vmem:[#allocation3 + $0xa0] sm:$0xff]
        %v312 = vld [vmem:[#allocation3 + $0xa8] sm:$0xff]
        %v313 = vld [vmem:[#allocation3 + $0xb0] sm:$0xff]
        %v314 = vld [vmem:[#allocation3 + $0xb8] sm:$0xff]
        %v315 = vld [vmem:[#allocation3 + $0xc0] sm:$0xff]
        %v316 = vld [vmem:[#allocation3 + $0xc8] sm:$0xff]
        %v317 = vld [vmem:[#allocation3 + $0xd0] sm:$0xff]
        %v318 = vld [vmem:[#allocation3 + $0xd8] sm:$0xff]
        %v319 = vld [vmem:[#allocation3 + $0xe0] sm:$0xff]
        %v320 = vld [vmem:[#allocation3 + $0xe8] sm:$0xff]
        %v321 = vld [vmem:[#allocation3 + $0xf0] sm:$0xff]
        %v322 = vld [vmem:[#allocation3 + $0xf8] sm:$0xff]
        %v323 = vld [vmem:[#allocation3 + $0x100] sm:$0xff]
        %v324 = vld [vmem:[#allocation3 + $0x108] sm:$0xff]
        %v325 = vld [vmem:[#allocation3 + $0x110] sm:$0xff]
        %v326 = vld [vmem:[#allocation3 + $0x118] sm:$0xff]
        %v327 = vld [vmem:[#allocation3 + $0x120] sm:$0xff]
        %v328 = vld [vmem:[#allocation3 + $0x128] sm:$0xff]
        %v329 = vld [vmem:[#allocation3 + $0x130] sm:$0xff]
        %v330 = vld [vmem:[#allocation3 + $0x138] sm:$0xff]
        %v331 = vld [vmem:[#allocation3 + $0x140] sm:$0xff]
        %v332 = vld [vmem:[#allocation3 + $0x148] sm:$0xff]
        %v333 = vld [vmem:[#allocation3 + $0x150] sm:$0xff]
        %v334 = vld [vmem:[#allocation3 + $0x158] sm:$0xff]
        %v335 = vld [vmem:[#allocation3 + $0x160] sm:$0xff]
        %v336 = vld [vmem:[#allocation3 + $0x168] sm:$0xff]
        %v337 = vld [vmem:[#allocation3 + $0x170] sm:$0xff]
        %v338 = vld [vmem:[#allocation3 + $0x178] sm:$0xff]
        %v339 = vld [vmem:[#allocation3 + $0x180] sm:$0xff]
        %v340 = vld [vmem:[#allocation3 + $0x188] sm:$0xff]
        %v341 = vld [vmem:[#allocation3 + $0x190] sm:$0xff]
        %v342 = vld [vmem:[#allocation3 + $0x198] sm:$0xff]
        %v343 = vld [vmem:[#allocation3 + $0x1a0] sm:$0xff]
        %v344 = vld [vmem:[#allocation3 + $0x1a8] sm:$0xff]
        %v345 = vld [vmem:[#allocation3 + $0x1b0] sm:$0xff]
        %v346 = vld [vmem:[#allocation3 + $0x1b8] sm:$0xff]
        %v347 = vld [vmem:[#allocation3 + $0x1c0] sm:$0xff]
        %v348 = vld [vmem:[#allocation3 + $0x1c8] sm:$0xff]
        %v349 = vld [vmem:[#allocation3 + $0x1d0] sm:$0xff]
        %v350 = vld [vmem:[#allocation3 + $0x1d8] sm:$0xff]
        %v351 = vld [vmem:[#allocation3 + $0x1e0] sm:$0xff]
        %v352 = vld [vmem:[#allocation3 + $0x1e8] sm:$0xff]
        %v353 = vld [vmem:[#allocation3 + $0x1f0] sm:$0xff]
        %v354 = vld [vmem:[#allocation3 + $0x1f8] sm:$0xff]
        %v355 = vld [vmem:[%s4] sm:$0x1]
        %v356 = vld [vmem:[%s246] sm:$0xff]
        %v357 = vld [vmem:[%s1] sm:$0xf]
        %v359 = vperm.slane %v357, 0
        %v360 = vperm.slane %v357, 1
        %v361 = vperm.slane %v357, 2
        %v362 = vperm.slane %v357, 3
        %vm367 = vcmask 261120
        %v369 = vsel %vm367, %v356, 0
        %371 = vmatpush.msra.mxu0 0.0
        %372 = vmatpush.msra.mxu0 0.0
        %373 = vmatpush.msra.mxu0 0.0
        %374 = vmatpush.msra.mxu0 0.0
        %375 = vmatpush.msra.mxu0 0.0
        %376 = vmatpush.msra.mxu0 0.0
        %377 = vmatpush.msra.mxu0 0.0
        %378 = vmatpush.msra.mxu0 0.0
        %379 = vmatpush.msra.mxu0 0.0
        %380 = vmatpush.msra.mxu0 0.0
        %381 = vmatpush.msra.mxu0 0.0
        %382 = vmatpush.msra.mxu0 0.0
        %383 = vmatpush.msra.mxu0 %v287
        %384 = vmatpush.msra.mxu0 %v283
        %385 = vmatpush.msra.mxu0 %v279
        %386 = vmatpush.msra.mxu0 %v275
        %387 = vmatmul.f32.gmra.mxu0 %v369
        %v388 = vpop.f32.mrf.mxu0
        %v389 = vadd.f32 %v359, %v388
        %390 = vdwg.mxu0
        %391 = vmatpush.msra.mxu0 0.0
        %392 = vmatpush.msra.mxu0 0.0
        %393 = vmatpush.msra.mxu0 0.0
        %394 = vmatpush.msra.mxu0 0.0
        %395 = vmatpush.msra.mxu0 0.0
        %396 = vmatpush.msra.mxu0 0.0
        %397 = vmatpush.msra.mxu0 0.0
        %398 = vmatpush.msra.mxu0 0.0
        %399 = vmatpush.msra.mxu0 0.0
        %400 = vmatpush.msra.mxu0 0.0
        %401 = vmatpush.msra.mxu0 0.0
        %402 = vmatpush.msra.mxu0 0.0
        %403 = vmatpush.msra.mxu0 %v288
        %404 = vmatpush.msra.mxu0 %v284
        %405 = vmatpush.msra.mxu0 %v280
        %406 = vmatpush.msra.mxu0 %v276
        %407 = vmatmul.f32.gmra.mxu0 %v369
        %v408 = vpop.f32.mrf.mxu0
        %v409 = vadd.f32 %v360, %v408
        %410 = vdwg.mxu0
        %411 = vmatpush.msra.mxu0 0.0
        %412 = vmatpush.msra.mxu0 0.0
        %413 = vmatpush.msra.mxu0 0.0
        %414 = vmatpush.msra.mxu0 0.0
        %415 = vmatpush.msra.mxu0 0.0
        %416 = vmatpush.msra.mxu0 0.0
        %417 = vmatpush.msra.mxu0 0.0
        %418 = vmatpush.msra.mxu0 0.0
        %419 = vmatpush.msra.mxu0 0.0
        %420 = vmatpush.msra.mxu0 0.0
        %421 = vmatpush.msra.mxu0 0.0
        %422 = vmatpush.msra.mxu0 0.0
        %423 = vmatpush.msra.mxu0 %v289
        %424 = vmatpush.msra.mxu0 %v285
        %425 = vmatpush.msra.mxu0 %v281
        %426 = vmatpush.msra.mxu0 %v277
        %427 = vmatmul.f32.gmra.mxu0 %v369
        %v428 = vpop.f32.mrf.mxu0
        %v429 = vadd.f32 %v361, %v428
        %430 = vdwg.mxu0
        %431 = vmatpush.msra.mxu0 0.0
        %432 = vmatpush.msra.mxu0 0.0
        %433 = vmatpush.msra.mxu0 0.0
        %434 = vmatpush.msra.mxu0 0.0
        %435 = vmatpush.msra.mxu0 0.0
        %436 = vmatpush.msra.mxu0 0.0
        %437 = vmatpush.msra.mxu0 0.0
        %438 = vmatpush.msra.mxu0 0.0
        %439 = vmatpush.msra.mxu0 0.0
        %440 = vmatpush.msra.mxu0 0.0
        %441 = vmatpush.msra.mxu0 0.0
        %442 = vmatpush.msra.mxu0 0.0
        %443 = vmatpush.msra.mxu0 %v290
        %444 = vmatpush.msra.mxu0 %v286
        %445 = vmatpush.msra.mxu0 %v282
        %446 = vmatpush.msra.mxu0 %v278
        %447 = vmatmul.f32.gmra.mxu0 %v369
        %v448 = vpop.f32.mrf.mxu0
        %v449 = vadd.f32 %v362, %v448
        %450 = vdwg.mxu0
        %vm451 = vcmp.ge.f32.partialorder %v389, 0.0
        %vm452 = vcmp.ge.f32.partialorder %v409, 0.0
        %vm453 = vcmp.ge.f32.partialorder %v429, 0.0
        %vm454 = vcmp.ge.f32.partialorder %v449, 0.0
        %v455 = vmul.f32 %v389, 0.33
        %v456 = vmul.f32 %v409, 0.33
        %v457 = vmul.f32 %v429, 0.33
        %v458 = vmul.f32 %v449, 0.33
        %v459 = vsel %vm451, %v389, %v455
        %v460 = vsel %vm452, %v409, %v456
        %v461 = vsel %vm453, %v429, %v457
        %v462 = vsel %vm454, %v449, %v458
        %v464 = vperm.slane %v355, 0
        %466 = vmatpush.msra.mxu0 %v306
        %467 = vmatpush.msra.mxu0 %v305
        %468 = vmatpush.msra.mxu0 %v304
        %469 = vmatpush.msra.mxu0 %v303
        %470 = vmatpush.msra.mxu0 %v302
        %471 = vmatpush.msra.mxu0 %v301
        %472 = vmatpush.msra.mxu0 %v300
        %473 = vmatpush.msra.mxu0 %v299
        %474 = vmatpush.msra.mxu0 %v298
        %475 = vmatpush.msra.mxu0 %v297
        %476 = vmatpush.msra.mxu0 %v296
        %477 = vmatpush.msra.mxu0 %v295
        %478 = vmatpush.msra.mxu0 %v294
        %479 = vmatpush.msra.mxu0 %v293
        %480 = vmatpush.msra.mxu0 %v292
        %481 = vmatpush.msra.mxu0 %v291
        %482 = vmatmul.f32.gmra.mxu0 %v459
        %v483 = vpop.f32.mrf.mxu0
        %v484 = vadd.f32 %v464, %v483
        %485 = vdwg.mxu0
        %486 = vmatpush.msra.mxu0 %v322
        %487 = vmatpush.msra.mxu0 %v321
        %488 = vmatpush.msra.mxu0 %v320
        %489 = vmatpush.msra.mxu0 %v319
        %490 = vmatpush.msra.mxu0 %v318
        %491 = vmatpush.msra.mxu0 %v317
        %492 = vmatpush.msra.mxu0 %v316
        %493 = vmatpush.msra.mxu0 %v315
        %494 = vmatpush.msra.mxu0 %v314
        %495 = vmatpush.msra.mxu0 %v313
        %496 = vmatpush.msra.mxu0 %v312
        %497 = vmatpush.msra.mxu0 %v311
        %498 = vmatpush.msra.mxu0 %v310
        %499 = vmatpush.msra.mxu0 %v309
        %500 = vmatpush.msra.mxu0 %v308
        %501 = vmatpush.msra.mxu0 %v307
        %502 = vmatmul.f32.gmra.mxu0 %v460
        %v503 = vpop.f32.mrf.mxu0
        %v504 = vadd.f32 %v484, %v503
        %505 = vdwg.mxu0
        %506 = vmatpush.msra.mxu0 %v338
        %507 = vmatpush.msra.mxu0 %v337
        %508 = vmatpush.msra.mxu0 %v336
        %509 = vmatpush.msra.mxu0 %v335
        %510 = vmatpush.msra.mxu0 %v334
        %511 = vmatpush.msra.mxu0 %v333
        %512 = vmatpush.msra.mxu0 %v332
        %513 = vmatpush.msra.mxu0 %v331
        %514 = vmatpush.msra.mxu0 %v330
        %515 = vmatpush.msra.mxu0 %v329
        %516 = vmatpush.msra.mxu0 %v328
        %517 = vmatpush.msra.mxu0 %v327
        %518 = vmatpush.msra.mxu0 %v326
        %519 = vmatpush.msra.mxu0 %v325
        %520 = vmatpush.msra.mxu0 %v324
        %521 = vmatpush.msra.mxu0 %v323
        %522 = vmatmul.f32.gmra.mxu0 %v461
        %v523 = vpop.f32.mrf.mxu0
        %v524 = vadd.f32 %v504, %v523
        %525 = vdwg.mxu0
        %526 = vmatpush.msra.mxu0 %v354
        %527 = vmatpush.msra.mxu0 %v353
        %528 = vmatpush.msra.mxu0 %v352
        %529 = vmatpush.msra.mxu0 %v351
        %530 = vmatpush.msra.mxu0 %v350
        %531 = vmatpush.msra.mxu0 %v349
        %532 = vmatpush.msra.mxu0 %v348
        %533 = vmatpush.msra.mxu0 %v347
        %534 = vmatpush.msra.mxu0 %v346
        %535 = vmatpush.msra.mxu0 %v345
        %536 = vmatpush.msra.mxu0 %v344
        %537 = vmatpush.msra.mxu0 %v343
        %538 = vmatpush.msra.mxu0 %v342
        %539 = vmatpush.msra.mxu0 %v341
        %540 = vmatpush.msra.mxu0 %v340
        %541 = vmatpush.msra.mxu0 %v339
        %542 = vmatmul.f32.gmra.mxu0 %v462
        %v543 = vpop.f32.mrf.mxu0
        %v544 = vadd.f32 %v524, %v543
        %545 = vdwg.mxu0
        %vm546 = vcmp.ge.f32.partialorder %v544, 0.0
        %v547 = vmul.f32 %v544, 0.33
        %v548 = vsel %vm546, %v544, %v547
        %vm549 = vcmask 523264
        %550 = vst.msk [vmem:[%s274] sm:$0xff] %vm549, %v548
        %s551 = scalar_lea.vmem %s246, 8 [#allocation2]
        %v552 = vld [vmem:[%s551] sm:$0xff]
        %s553 = scalar_lea.vmem %s1, 4
        %v554 = vld [vmem:[%s553] sm:$0xf]
        %v556 = vperm.slane %v554, 0
        %v557 = vperm.slane %v554, 1
        %v558 = vperm.slane %v554, 2
        %v559 = vperm.slane %v554, 3
        %v565 = vsel %vm367, %v552, 0
        %567 = vmatpush.msra.mxu0 0.0
        %568 = vmatpush.msra.mxu0 0.0
        %569 = vmatpush.msra.mxu0 0.0
        %570 = vmatpush.msra.mxu0 0.0
        %571 = vmatpush.msra.mxu0 0.0
        %572 = vmatpush.msra.mxu0 0.0
        %573 = vmatpush.msra.mxu0 0.0
        %574 = vmatpush.msra.mxu0 0.0
        %575 = vmatpush.msra.mxu0 0.0
        %576 = vmatpush.msra.mxu0 0.0
        %577 = vmatpush.msra.mxu0 0.0
        %578 = vmatpush.msra.mxu0 0.0
        %579 = vmatpush.msra.mxu0 %v287
        %580 = vmatpush.msra.mxu0 %v283
        %581 = vmatpush.msra.mxu0 %v279
        %582 = vmatpush.msra.mxu0 %v275
        %583 = vmatmul.f32.gmra.mxu0 %v565
        %v584 = vpop.f32.mrf.mxu0
        %v585 = vadd.f32 %v556, %v584
        %586 = vdwg.mxu0
        %587 = vmatpush.msra.mxu0 0.0
        %588 = vmatpush.msra.mxu0 0.0
        %589 = vmatpush.msra.mxu0 0.0
        %590 = vmatpush.msra.mxu0 0.0
        %591 = vmatpush.msra.mxu0 0.0
        %592 = vmatpush.msra.mxu0 0.0
        %593 = vmatpush.msra.mxu0 0.0
        %594 = vmatpush.msra.mxu0 0.0
        %595 = vmatpush.msra.mxu0 0.0
        %596 = vmatpush.msra.mxu0 0.0
        %597 = vmatpush.msra.mxu0 0.0
        %598 = vmatpush.msra.mxu0 0.0
        %599 = vmatpush.msra.mxu0 %v288
        %600 = vmatpush.msra.mxu0 %v284
        %601 = vmatpush.msra.mxu0 %v280
        %602 = vmatpush.msra.mxu0 %v276
        %603 = vmatmul.f32.gmra.mxu0 %v565
        %v604 = vpop.f32.mrf.mxu0
        %v605 = vadd.f32 %v557, %v604
        %606 = vdwg.mxu0
        %607 = vmatpush.msra.mxu0 0.0
        %608 = vmatpush.msra.mxu0 0.0
        %609 = vmatpush.msra.mxu0 0.0
        %610 = vmatpush.msra.mxu0 0.0
        %611 = vmatpush.msra.mxu0 0.0
        %612 = vmatpush.msra.mxu0 0.0
        %613 = vmatpush.msra.mxu0 0.0
        %614 = vmatpush.msra.mxu0 0.0
        %615 = vmatpush.msra.mxu0 0.0
        %616 = vmatpush.msra.mxu0 0.0
        %617 = vmatpush.msra.mxu0 0.0
        %618 = vmatpush.msra.mxu0 0.0
        %619 = vmatpush.msra.mxu0 %v289
        %620 = vmatpush.msra.mxu0 %v285
        %621 = vmatpush.msra.mxu0 %v281
        %622 = vmatpush.msra.mxu0 %v277
        %623 = vmatmul.f32.gmra.mxu0 %v565
        %v624 = vpop.f32.mrf.mxu0
        %v625 = vadd.f32 %v558, %v624
        %626 = vdwg.mxu0
        %627 = vmatpush.msra.mxu0 0.0
        %628 = vmatpush.msra.mxu0 0.0
        %629 = vmatpush.msra.mxu0 0.0
        %630 = vmatpush.msra.mxu0 0.0
        %631 = vmatpush.msra.mxu0 0.0
        %632 = vmatpush.msra.mxu0 0.0
        %633 = vmatpush.msra.mxu0 0.0
        %634 = vmatpush.msra.mxu0 0.0
        %635 = vmatpush.msra.mxu0 0.0
        %636 = vmatpush.msra.mxu0 0.0
        %637 = vmatpush.msra.mxu0 0.0
        %638 = vmatpush.msra.mxu0 0.0
        %639 = vmatpush.msra.mxu0 %v290
        %640 = vmatpush.msra.mxu0 %v286
        %641 = vmatpush.msra.mxu0 %v282
        %642 = vmatpush.msra.mxu0 %v278
        %643 = vmatmul.f32.gmra.mxu0 %v565
        %v644 = vpop.f32.mrf.mxu0
        %v645 = vadd.f32 %v559, %v644
        %646 = vdwg.mxu0
        %vm647 = vcmp.ge.f32.partialorder %v585, 0.0
        %vm648 = vcmp.ge.f32.partialorder %v605, 0.0
        %vm649 = vcmp.ge.f32.partialorder %v625, 0.0
        %vm650 = vcmp.ge.f32.partialorder %v645, 0.0
        %v651 = vmul.f32 %v585, 0.33
        %v652 = vmul.f32 %v605, 0.33
        %v653 = vmul.f32 %v625, 0.33
        %v654 = vmul.f32 %v645, 0.33
        %v655 = vsel %vm647, %v585, %v651
        %v656 = vsel %vm648, %v605, %v652
        %v657 = vsel %vm649, %v625, %v653
        %v658 = vsel %vm650, %v645, %v654
        %659 = vmatpush.msra.mxu0 %v306
        %660 = vmatpush.msra.mxu0 %v305
        %661 = vmatpush.msra.mxu0 %v304
        %662 = vmatpush.msra.mxu0 %v303
        %663 = vmatpush.msra.mxu0 %v302
        %664 = vmatpush.msra.mxu0 %v301
        %665 = vmatpush.msra.mxu0 %v300
        %666 = vmatpush.msra.mxu0 %v299
        %667 = vmatpush.msra.mxu0 %v298
        %668 = vmatpush.msra.mxu0 %v297
        %669 = vmatpush.msra.mxu0 %v296
        %670 = vmatpush.msra.mxu0 %v295
        %671 = vmatpush.msra.mxu0 %v294
        %672 = vmatpush.msra.mxu0 %v293
        %673 = vmatpush.msra.mxu0 %v292
        %674 = vmatpush.msra.mxu0 %v291
        %675 = vmatmul.f32.gmra.mxu0 %v655
        %v676 = vpop.f32.mrf.mxu0
        %v677 = vadd.f32 %v464, %v676
        %678 = vdwg.mxu0
        %679 = vmatpush.msra.mxu0 %v322
        %680 = vmatpush.msra.mxu0 %v321
        %681 = vmatpush.msra.mxu0 %v320
        %682 = vmatpush.msra.mxu0 %v319
        %683 = vmatpush.msra.mxu0 %v318
        %684 = vmatpush.msra.mxu0 %v317
        %685 = vmatpush.msra.mxu0 %v316
        %686 = vmatpush.msra.mxu0 %v315
        %687 = vmatpush.msra.mxu0 %v314
        %688 = vmatpush.msra.mxu0 %v313
        %689 = vmatpush.msra.mxu0 %v312
        %690 = vmatpush.msra.mxu0 %v311
        %691 = vmatpush.msra.mxu0 %v310
        %692 = vmatpush.msra.mxu0 %v309
        %693 = vmatpush.msra.mxu0 %v308
        %694 = vmatpush.msra.mxu0 %v307
        %695 = vmatmul.f32.gmra.mxu0 %v656
        %v696 = vpop.f32.mrf.mxu0
        %v697 = vadd.f32 %v677, %v696
        %698 = vdwg.mxu0
        %699 = vmatpush.msra.mxu0 %v338
        %700 = vmatpush.msra.mxu0 %v337
        %701 = vmatpush.msra.mxu0 %v336
        %702 = vmatpush.msra.mxu0 %v335
        %703 = vmatpush.msra.mxu0 %v334
        %704 = vmatpush.msra.mxu0 %v333
        %705 = vmatpush.msra.mxu0 %v332
        %706 = vmatpush.msra.mxu0 %v331
        %707 = vmatpush.msra.mxu0 %v330
        %708 = vmatpush.msra.mxu0 %v329
        %709 = vmatpush.msra.mxu0 %v328
        %710 = vmatpush.msra.mxu0 %v327
        %711 = vmatpush.msra.mxu0 %v326
        %712 = vmatpush.msra.mxu0 %v325
        %713 = vmatpush.msra.mxu0 %v324
        %714 = vmatpush.msra.mxu0 %v323
        %715 = vmatmul.f32.gmra.mxu0 %v657
        %v716 = vpop.f32.mrf.mxu0
        %v717 = vadd.f32 %v697, %v716
        %718 = vdwg.mxu0
        %719 = vmatpush.msra.mxu0 %v354
        %720 = vmatpush.msra.mxu0 %v353
        %721 = vmatpush.msra.mxu0 %v352
        %722 = vmatpush.msra.mxu0 %v351
        %723 = vmatpush.msra.mxu0 %v350
        %724 = vmatpush.msra.mxu0 %v349
        %725 = vmatpush.msra.mxu0 %v348
        %726 = vmatpush.msra.mxu0 %v347
        %727 = vmatpush.msra.mxu0 %v346
        %728 = vmatpush.msra.mxu0 %v345
        %729 = vmatpush.msra.mxu0 %v344
        %730 = vmatpush.msra.mxu0 %v343
        %731 = vmatpush.msra.mxu0 %v342
        %732 = vmatpush.msra.mxu0 %v341
        %733 = vmatpush.msra.mxu0 %v340
        %734 = vmatpush.msra.mxu0 %v339
        %735 = vmatmul.f32.gmra.mxu0 %v658
        %v736 = vpop.f32.mrf.mxu0
        %v737 = vadd.f32 %v717, %v736
        %738 = vdwg.mxu0
        %vm739 = vcmp.ge.f32.partialorder %v737, 0.0
        %v740 = vmul.f32 %v737, 0.33
        %v741 = vsel %vm739, %v737, %v740
        %s742 = scalar_lea.vmem %s274, 8 [#allocation5]
        %743 = vst.msk [vmem:[%s742] sm:$0xff] %vm549, %v741
        %s744 = sand.u32 %s135, 1
        %s745 = sand.u32 %s135, 1
        %s746 = smul.addr %s745, 16
        %s747 = scalar_lea.vmem [#allocation5], %s746
        // Predicated region
        $region83: #{brainnetcnn_forward.4} parent=73 // pred_check
          %p748 = pneg %p145
        $region84: #{brainnetcnn_forward.4} parent=73 // pred_check_branch
          %750 = sbr.rel (%p748) target = $region86
        $region85: #{brainnetcnn_forward.4} parent=73 // pred_region
          %s751 = smul.addr %s17, 8
          %s752 = scalar_lea.vmem %s5, %s751
          // Predicated region
          $region87: #{brainnetcnn_forward.4} parent=85 // pred_check
            _
          $region88: #{brainnetcnn_forward.4} parent=85 // pred_check_branch
            %754 = sbr.rel (0) target = $region90
          $region89: #{brainnetcnn_forward.4} parent=85 // pred_region
            // Predicated region
            $region91: #{brainnetcnn_forward.4} parent=89 // pred_check
              _
            $region92: #{brainnetcnn_forward.4} parent=89 // pred_check_branch
              %756 = sbr.rel (0) target = $region94
            $region93: #{brainnetcnn_forward.4} parent=89 // pred_region
              // Predicated region
              $region106: #{brainnetcnn_forward.4} parent=93 // pred_check
                _
              $region107: #{brainnetcnn_forward.4} parent=93 // pred_check_branch
                %774 = sbr.rel (0) target = $region109
              $region108: #{brainnetcnn_forward.4} parent=93 // pred_region
                loop: start=0, step=1, limit=1
                $region110: #{brainnetcnn_forward.4} parent=108 // loop_pre_header
                  _
                $region111: #{brainnetcnn_forward.4} parent=108 // loop_header
                  %s776 = sphi 0, %s780
                  %p777 = scmp.ge.s32.totalorder %s776, 1
                  %s781 = sphi %s747, %s747
                  %s782 = sphi %s752, %s752
                $region112: #{brainnetcnn_forward.4} parent=108 // loop_header_branch
                  %779 = sbr.rel (%p777) target = $region116
                $region113: #{brainnetcnn_forward.4} parent=108 // loop_body
                  %v783 = vld [vmem:[%s781] sm:$0xff]
                  %784 = vst [vmem:[%s782] sm:$0xff] %v783
                  %v785 = vld [vmem:[%s781 + $0x8] sm:$0xff]
                  %786 = vst [vmem:[%s782 + $0x10] sm:$0xff] %v785
                $region114: #{brainnetcnn_forward.4} parent=108 // loop_footer
                  %s780 = sadd.s32 1, %s776
                $region115: #{brainnetcnn_forward.4} parent=108 // loop_footer_branch
                  %775 = sbr.rel target = $region111
                $region116: #{brainnetcnn_forward.4} parent=108 // loop_exit
                  _
              $region109: #{brainnetcnn_forward.4} parent=93 // pred_fallthru
                _
              // Predicated region
              $region117: #{brainnetcnn_forward.4} parent=93 // pred_check
                _
              $region118: #{brainnetcnn_forward.4} parent=93 // pred_check_branch
                %788 = sbr.rel target = $region120
              $region119: #{brainnetcnn_forward.4} parent=93 // pred_region
                _
              $region120: #{brainnetcnn_forward.4} parent=93 // pred_fallthru
                _
            $region94: #{brainnetcnn_forward.4} parent=89 // pred_fallthru
              _
            // Predicated region
            $region95: #{brainnetcnn_forward.4} parent=89 // pred_check
              _
            $region96: #{brainnetcnn_forward.4} parent=89 // pred_check_branch
              %758 = sbr.rel target = $region98
            $region97: #{brainnetcnn_forward.4} parent=89 // pred_region
              %s760 = ssub.s32 256, 1
              loop: start=0, step=1, limit=1
              $region99: #{brainnetcnn_forward.4} parent=97 // loop_pre_header
                _
              $region100: #{brainnetcnn_forward.4} parent=97 // loop_header
                %s762 = sphi 0, %s766
                %p763 = scmp.ge.s32.totalorder %s762, 1
                %s767 = sphi %s747, %s747
                %s768 = sphi %s752, %s752
              $region101: #{brainnetcnn_forward.4} parent=97 // loop_header_branch
                %765 = sbr.rel (%p763) target = $region105
              $region102: #{brainnetcnn_forward.4} parent=97 // loop_body
                %v769 = vld [vmem:[%s767] sm:%s760]
                %770 = vst [vmem:[%s768] sm:%s760] %v769
                %v771 = vld [vmem:[%s767 + $0x8] sm:%s760]
                %772 = vst [vmem:[%s768 + $0x10] sm:%s760] %v771
              $region103: #{brainnetcnn_forward.4} parent=97 // loop_footer
                %s766 = sadd.s32 1, %s762
              $region104: #{brainnetcnn_forward.4} parent=97 // loop_footer_branch
                %761 = sbr.rel target = $region100
              $region105: #{brainnetcnn_forward.4} parent=97 // loop_exit
                _
            $region98: #{brainnetcnn_forward.4} parent=89 // pred_fallthru
              _
          $region90: #{brainnetcnn_forward.4} parent=85 // pred_fallthru
            _
          %789 = vnop
        $region86: #{brainnetcnn_forward.4} parent=73 // pred_fallthru
          _
      $region74: #{brainnetcnn_forward.4} parent=5 // pred_fallthru
        _
      %p790 = scmp.le.s32.totalorder 2, %s12
      // Predicated region
      $region121: #{brainnetcnn_forward.4} parent=5 // pred_check
        %p791 = pneg %p790
      $region122: #{brainnetcnn_forward.4} parent=5 // pred_check_branch
        %793 = sbr.rel (%p791) target = $region124
      $region123: #{brainnetcnn_forward.4} parent=5 // pred_region
        %s794 = ssub.s32 %s12, 2
        // Predicated region
        $region125: #{brainnetcnn_forward.4} parent=123 // pred_check
          %p795 = pneg %p151
        $region126: #{brainnetcnn_forward.4} parent=123 // pred_check_branch
          %797 = sbr.rel (%p795) target = $region128
        $region127: #{brainnetcnn_forward.4} parent=123 // pred_region
          %s798 = sand.u32 %s136, 1
          %s799 = sand.u32 %s136, 1
          %s800 = smul.addr %s799, 16
          %s801 = scalar_lea.vmem [#allocation5], %s800
        $region128: #{brainnetcnn_forward.4} parent=123 // pred_fallthru
          _
      $region124: #{brainnetcnn_forward.4} parent=5 // pred_fallthru
        _
    $region6: #{brainnetcnn_forward.4} parent=1 // loop_footer
      %s16 = sadd.s32 1, %s12
    $region7: #{brainnetcnn_forward.4} parent=1 // loop_footer_branch
      %11 = sbr.rel target = $region3
    $region8: #{brainnetcnn_forward.4} parent=1 // loop_exit
      _
    %802 = vsyncpa [#allocation4], 1
    %s803 = scalar_lea.sflag [#allocation4], 1
    %804 = vsyncpa %s803, 1

// kernel: brainnetcnn_forward.5
$region0: #{brainnetcnn_forward.5}
  #allocation0 [shape = 'u32[]', space=smem, size = 0x4, offset = 0x4, fixed_abs, tag = 'smem constant byte address 0x4 - core index']
  #allocation1 [shape = 'u32[72,128]{1,0:T(1,128)}', space=vmem, size = 0x9000, scoped, tag = 'internal scratch']
  %s0 = inlined_call_operand.vmem [shape: f32[2,1024], index: 0, kind: input, shape index: {}]
  %s1 = inlined_call_operand.vmem [shape: f32[1024,128], index: 1, kind: input, shape index: {}]
  %s2 = inlined_call_operand.vmem [shape: f32[1,128], index: 2, kind: input, shape index: {}]
  %s3 = inlined_call_operand.vmem [shape: f32[128,64], index: 3, kind: input, shape index: {}]
  %s4 = inlined_call_operand.vmem [shape: f32[1,64], index: 4, kind: input, shape index: {}]
  %s5 = inlined_call_operand.vmem [shape: f32[64,2], index: 5, kind: input, shape index: {}]
  %s6 = inlined_call_operand.vmem [shape: f32[1,2], index: 6, kind: input, shape index: {}]
  %s7 = inlined_call_operand.hbm [shape: f32[2,2], index: 7, kind: output, shape index: {}]
  %s8 = sld [smem:[#allocation0]]
  $region38: #{brainnetcnn_forward.5} parent=0
    _
  %s10 = ssub.s32 1, %s8
  %s11 = scalar_select 0, %s10, %s8
  $region1: #{brainnetcnn_forward.5} parent=0
    #allocation2 [shape = 'u8[1024]{0}', space=vmem, size = 0x400, scoped, tag = 'output window, operand 0, single buffered']
    #allocation3 [shape = 's32[1]{0}', space=sflag, size = 0x4, scoped, tag = 'scoped memory for brainnetcnn_forward.5']
    %12 = vsyncpa [#allocation3], 0
    // Predicated region
    $region2: #{brainnetcnn_forward.5} parent=1 // pred_check
      _
    $region3: #{brainnetcnn_forward.5} parent=1 // pred_check_branch
      %14 = sbr.rel (0) target = $region5
    $region4: #{brainnetcnn_forward.5} parent=1 // pred_region
      _
    $region5: #{brainnetcnn_forward.5} parent=1 // pred_fallthru
      _
    // Predicated region
    $region6: #{brainnetcnn_forward.5} parent=1 // pred_check
      _
    $region7: #{brainnetcnn_forward.5} parent=1 // pred_check_branch
      %16 = sbr.rel (0) target = $region9
    $region8: #{brainnetcnn_forward.5} parent=1 // pred_region
      _
    $region9: #{brainnetcnn_forward.5} parent=1 // pred_fallthru
      _
    // Predicated region
    $region10: #{brainnetcnn_forward.5} parent=1 // pred_check
      _
    $region11: #{brainnetcnn_forward.5} parent=1 // pred_check_branch
      %18 = sbr.rel (0) target = $region13
    $region12: #{brainnetcnn_forward.5} parent=1 // pred_region
      _
    $region13: #{brainnetcnn_forward.5} parent=1 // pred_fallthru
      _
    // Predicated region
    $region14: #{brainnetcnn_forward.5} parent=1 // pred_check
      _
    $region15: #{brainnetcnn_forward.5} parent=1 // pred_check_branch
      %20 = sbr.rel (0) target = $region17
    $region16: #{brainnetcnn_forward.5} parent=1 // pred_region
      _
    $region17: #{brainnetcnn_forward.5} parent=1 // pred_fallthru
      _
    // Predicated region
    $region18: #{brainnetcnn_forward.5} parent=1 // pred_check
      _
    $region19: #{brainnetcnn_forward.5} parent=1 // pred_check_branch
      %22 = sbr.rel (0) target = $region21
    $region20: #{brainnetcnn_forward.5} parent=1 // pred_region
      _
    $region21: #{brainnetcnn_forward.5} parent=1 // pred_fallthru
      _
    // Predicated region
    $region22: #{brainnetcnn_forward.5} parent=1 // pred_check
      _
    $region23: #{brainnetcnn_forward.5} parent=1 // pred_check_branch
      %24 = sbr.rel (0) target = $region25
    $region24: #{brainnetcnn_forward.5} parent=1 // pred_region
      _
    $region25: #{brainnetcnn_forward.5} parent=1 // pred_fallthru
      _
    // Predicated region
    $region26: #{brainnetcnn_forward.5} parent=1 // pred_check
      _
    $region27: #{brainnetcnn_forward.5} parent=1 // pred_check_branch
      %26 = sbr.rel (0) target = $region29
    $region28: #{brainnetcnn_forward.5} parent=1 // pred_region
      _
    $region29: #{brainnetcnn_forward.5} parent=1 // pred_fallthru
      _
    %v27 = vld [vmem:[%s0] sm:$0xff]
    %v28 = vld [vmem:[%s0 + $0x8] sm:$0xff]
    %v29 = vld [vmem:[%s1] sm:$0xff]
    %v30 = vld [vmem:[%s1 + $0x8] sm:$0xff]
    %v31 = vld [vmem:[%s1 + $0x10] sm:$0xff]
    %v32 = vld [vmem:[%s1 + $0x18] sm:$0xff]
    %v33 = vld [vmem:[%s1 + $0x20] sm:$0xff]
    %v34 = vld [vmem:[%s1 + $0x28] sm:$0xff]
    %v35 = vld [vmem:[%s1 + $0x30] sm:$0xff]
    %v36 = vld [vmem:[%s1 + $0x38] sm:$0xff]
    %v37 = vld [vmem:[%s1 + $0x40] sm:$0xff]
    %v38 = vld [vmem:[%s1 + $0x48] sm:$0xff]
    %v39 = vld [vmem:[%s1 + $0x50] sm:$0xff]
    %v40 = vld [vmem:[%s1 + $0x58] sm:$0xff]
    %v41 = vld [vmem:[%s1 + $0x60] sm:$0xff]
    %v42 = vld [vmem:[%s1 + $0x68] sm:$0xff]
    %v43 = vld [vmem:[%s1 + $0x70] sm:$0xff]
    %v44 = vld [vmem:[%s1 + $0x78] sm:$0xff]
    %v45 = vld [vmem:[%s1 + $0x80] sm:$0xff]
    %v46 = vld [vmem:[%s1 + $0x88] sm:$0xff]
    %v47 = vld [vmem:[%s1 + $0x90] sm:$0xff]
    %v48 = vld [vmem:[%s1 + $0x98] sm:$0xff]
    %v49 = vld [vmem:[%s1 + $0xa0] sm:$0xff]
    %v50 = vld [vmem:[%s1 + $0xa8] sm:$0xff]
    %v51 = vld [vmem:[%s1 + $0xb0] sm:$0xff]
    %v52 = vld [vmem:[%s1 + $0xb8] sm:$0xff]
    %v53 = vld [vmem:[%s1 + $0xc0] sm:$0xff]
    %v54 = vld [vmem:[%s1 + $0xc8] sm:$0xff]
    %v55 = vld [vmem:[%s1 + $0xd0] sm:$0xff]
    %v56 = vld [vmem:[%s1 + $0xd8] sm:$0xff]
    %v57 = vld [vmem:[%s1 + $0xe0] sm:$0xff]
    %v58 = vld [vmem:[%s1 + $0xe8] sm:$0xff]
    %v59 = vld [vmem:[%s1 + $0xf0] sm:$0xff]
    %v60 = vld [vmem:[%s1 + $0xf8] sm:$0xff]
    %v61 = vld [vmem:[%s1 + $0x100] sm:$0xff]
    %v62 = vld [vmem:[%s1 + $0x108] sm:$0xff]
    %v63 = vld [vmem:[%s1 + $0x110] sm:$0xff]
    %v64 = vld [vmem:[%s1 + $0x118] sm:$0xff]
    %v65 = vld [vmem:[%s1 + $0x120] sm:$0xff]
    %v66 = vld [vmem:[%s1 + $0x128] sm:$0xff]
    %v67 = vld [vmem:[%s1 + $0x130] sm:$0xff]
    %v68 = vld [vmem:[%s1 + $0x138] sm:$0xff]
    %v69 = vld [vmem:[%s1 + $0x140] sm:$0xff]
    %v70 = vld [vmem:[%s1 + $0x148] sm:$0xff]
    %v71 = vld [vmem:[%s1 + $0x150] sm:$0xff]
    %v72 = vld [vmem:[%s1 + $0x158] sm:$0xff]
    %v73 = vld [vmem:[%s1 + $0x160] sm:$0xff]
    %v74 = vld [vmem:[%s1 + $0x168] sm:$0xff]
    %v75 = vld [vmem:[%s1 + $0x170] sm:$0xff]
    %v76 = vld [vmem:[%s1 + $0x178] sm:$0xff]
    %v77 = vld [vmem:[%s1 + $0x180] sm:$0xff]
    %v78 = vld [vmem:[%s1 + $0x188] sm:$0xff]
    %v79 = vld [vmem:[%s1 + $0x190] sm:$0xff]
    %v80 = vld [vmem:[%s1 + $0x198] sm:$0xff]
    %v81 = vld [vmem:[%s1 + $0x1a0] sm:$0xff]
    %v82 = vld [vmem:[%s1 + $0x1a8] sm:$0xff]
    %v83 = vld [vmem:[%s1 + $0x1b0] sm:$0xff]
    %v84 = vld [vmem:[%s1 + $0x1b8] sm:$0xff]
    %v85 = vld [vmem:[%s1 + $0x1c0] sm:$0xff]
    %v86 = vld [vmem:[%s1 + $0x1c8] sm:$0xff]
    %v87 = vld [vmem:[%s1 + $0x1d0] sm:$0xff]
    %v88 = vld [vmem:[%s1 + $0x1d8] sm:$0xff]
    %v89 = vld [vmem:[%s1 + $0x1e0] sm:$0xff]
    %v90 = vld [vmem:[%s1 + $0x1e8] sm:$0xff]
    %v91 = vld [vmem:[%s1 + $0x1f0] sm:$0xff]
    %v92 = vld [vmem:[%s1 + $0x1f8] sm:$0xff]
    %v93 = vld [vmem:[%s1 + $0x200] sm:$0xff]
    %v94 = vld [vmem:[%s1 + $0x208] sm:$0xff]
    %v95 = vld [vmem:[%s1 + $0x210] sm:$0xff]
    %v96 = vld [vmem:[%s1 + $0x218] sm:$0xff]
    %v97 = vld [vmem:[%s1 + $0x220] sm:$0xff]
    %v98 = vld [vmem:[%s1 + $0x228] sm:$0xff]
    %v99 = vld [vmem:[%s1 + $0x230] sm:$0xff]
    %v100 = vld [vmem:[%s1 + $0x238] sm:$0xff]
    %v101 = vld [vmem:[%s1 + $0x240] sm:$0xff]
    %v102 = vld [vmem:[%s1 + $0x248] sm:$0xff]
    %v103 = vld [vmem:[%s1 + $0x250] sm:$0xff]
    %v104 = vld [vmem:[%s1 + $0x258] sm:$0xff]
    %v105 = vld [vmem:[%s1 + $0x260] sm:$0xff]
    %v106 = vld [vmem:[%s1 + $0x268] sm:$0xff]
    %v107 = vld [vmem:[%s1 + $0x270] sm:$0xff]
    %v108 = vld [vmem:[%s1 + $0x278] sm:$0xff]
    %v109 = vld [vmem:[%s1 + $0x280] sm:$0xff]
    %v110 = vld [vmem:[%s1 + $0x288] sm:$0xff]
    %v111 = vld [vmem:[%s1 + $0x290] sm:$0xff]
    %v112 = vld [vmem:[%s1 + $0x298] sm:$0xff]
    %v113 = vld [vmem:[%s1 + $0x2a0] sm:$0xff]
    %v114 = vld [vmem:[%s1 + $0x2a8] sm:$0xff]
    %v115 = vld [vmem:[%s1 + $0x2b0] sm:$0xff]
    %v116 = vld [vmem:[%s1 + $0x2b8] sm:$0xff]
    %v117 = vld [vmem:[%s1 + $0x2c0] sm:$0xff]
    %v118 = vld [vmem:[%s1 + $0x2c8] sm:$0xff]
    %v119 = vld [vmem:[%s1 + $0x2d0] sm:$0xff]
    %v120 = vld [vmem:[%s1 + $0x2d8] sm:$0xff]
    %v121 = vld [vmem:[%s1 + $0x2e0] sm:$0xff]
    %v122 = vld [vmem:[%s1 + $0x2e8] sm:$0xff]
    %v123 = vld [vmem:[%s1 + $0x2f0] sm:$0xff]
    %v124 = vld [vmem:[%s1 + $0x2f8] sm:$0xff]
    %v125 = vld [vmem:[%s1 + $0x300] sm:$0xff]
    %v126 = vld [vmem:[%s1 + $0x308] sm:$0xff]
    %v127 = vld [vmem:[%s1 + $0x310] sm:$0xff]
    %v128 = vld [vmem:[%s1 + $0x318] sm:$0xff]
    %v129 = vld [vmem:[%s1 + $0x320] sm:$0xff]
    %v130 = vld [vmem:[%s1 + $0x328] sm:$0xff]
    %v131 = vld [vmem:[%s1 + $0x330] sm:$0xff]
    %v132 = vld [vmem:[%s1 + $0x338] sm:$0xff]
    %v133 = vld [vmem:[%s1 + $0x340] sm:$0xff]
    %v134 = vld [vmem:[%s1 + $0x348] sm:$0xff]
    %v135 = vld [vmem:[%s1 + $0x350] sm:$0xff]
    %v136 = vld [vmem:[%s1 + $0x358] sm:$0xff]
    %v137 = vld [vmem:[%s1 + $0x360] sm:$0xff]
    %v138 = vld [vmem:[%s1 + $0x368] sm:$0xff]
    %v139 = vld [vmem:[%s1 + $0x370] sm:$0xff]
    %v140 = vld [vmem:[%s1 + $0x378] sm:$0xff]
    %v141 = vld [vmem:[%s1 + $0x380] sm:$0xff]
    %v142 = vld [vmem:[%s1 + $0x388] sm:$0xff]
    %v143 = vld [vmem:[%s1 + $0x390] sm:$0xff]
    %v144 = vld [vmem:[%s1 + $0x398] sm:$0xff]
    %v145 = vld [vmem:[%s1 + $0x3a0] sm:$0xff]
    %v146 = vld [vmem:[%s1 + $0x3a8] sm:$0xff]
    %v147 = vld [vmem:[%s1 + $0x3b0] sm:$0xff]
    %v148 = vld [vmem:[%s1 + $0x3b8] sm:$0xff]
    %v149 = vld [vmem:[%s1 + $0x3c0] sm:$0xff]
    %v150 = vld [vmem:[%s1 + $0x3c8] sm:$0xff]
    %v151 = vld [vmem:[%s1 + $0x3d0] sm:$0xff]
    %v152 = vld [vmem:[%s1 + $0x3d8] sm:$0xff]
    %v153 = vld [vmem:[%s1 + $0x3e0] sm:$0xff]
    %v154 = vld [vmem:[%s1 + $0x3e8] sm:$0xff]
    %v155 = vld [vmem:[%s1 + $0x3f0] sm:$0xff]
    %v156 = vld [vmem:[%s1 + $0x3f8] sm:$0xff]
    %v157 = vld [vmem:[%s2] sm:$0x1]
    %v159 = vperm.slane %v157, 0
    %163 = vst [vmem:[#allocation1] ss:$4 sm:$0xff] %v27
    %s164 = scalar_lea.vmem [#allocation1], 32
    %165 = vst [vmem:[%s164] ss:$4 sm:$0xff] %v28
    %v166 = vld.sshfl [vmem:[#allocation1] sm:$0xff pattern:$0x73625140]
    %v167 = vld.sshfl [vmem:[#allocation1 + $0x8] sm:$0xff pattern:$0x73625140]
    %v168 = vld.sshfl [vmem:[#allocation1 + $0x10] sm:$0xff pattern:$0x73625140]
    %v169 = vld.sshfl [vmem:[#allocation1 + $0x18] sm:$0xff pattern:$0x73625140]
    %v170 = vld.sshfl [vmem:[#allocation1 + $0x20] sm:$0xff pattern:$0x73625140]
    %v171 = vld.sshfl [vmem:[#allocation1 + $0x28] sm:$0xff pattern:$0x73625140]
    %v172 = vld.sshfl [vmem:[#allocation1 + $0x30] sm:$0xff pattern:$0x73625140]
    %v173 = vld.sshfl [vmem:[#allocation1 + $0x38] sm:$0xff pattern:$0x73625140]
    %182 = vmatpush.msra.mxu0 %v44
    %183 = vmatpush.msra.mxu0 %v43
    %184 = vmatpush.msra.mxu0 %v42
    %185 = vmatpush.msra.mxu0 %v41
    %186 = vmatpush.msra.mxu0 %v40
    %187 = vmatpush.msra.mxu0 %v39
    %188 = vmatpush.msra.mxu0 %v38
    %189 = vmatpush.msra.mxu0 %v37
    %190 = vmatpush.msra.mxu0 %v36
    %191 = vmatpush.msra.mxu0 %v35
    %192 = vmatpush.msra.mxu0 %v34
    %193 = vmatpush.msra.mxu0 %v33
    %194 = vmatpush.msra.mxu0 %v32
    %195 = vmatpush.msra.mxu0 %v31
    %196 = vmatpush.msra.mxu0 %v30
    %197 = vmatpush.msra.mxu0 %v29
    %198 = vmatmul.f32.gmra.mxu0 %v166
    %v199 = vpop.f32.mrf.mxu0
    %v200 = vadd.f32 %v159, %v199
    %201 = vdwg.mxu0
    %202 = vmatpush.msra.mxu0 %v60
    %203 = vmatpush.msra.mxu0 %v59
    %204 = vmatpush.msra.mxu0 %v58
    %205 = vmatpush.msra.mxu0 %v57
    %206 = vmatpush.msra.mxu0 %v56
    %207 = vmatpush.msra.mxu0 %v55
    %208 = vmatpush.msra.mxu0 %v54
    %209 = vmatpush.msra.mxu0 %v53
    %210 = vmatpush.msra.mxu0 %v52
    %211 = vmatpush.msra.mxu0 %v51
    %212 = vmatpush.msra.mxu0 %v50
    %213 = vmatpush.msra.mxu0 %v49
    %214 = vmatpush.msra.mxu0 %v48
    %215 = vmatpush.msra.mxu0 %v47
    %216 = vmatpush.msra.mxu0 %v46
    %217 = vmatpush.msra.mxu0 %v45
    %218 = vmatmul.f32.gmra.mxu0 %v167
    %v219 = vpop.f32.mrf.mxu0
    %v220 = vadd.f32 %v200, %v219
    %221 = vdwg.mxu0
    %222 = vmatpush.msra.mxu0 %v76
    %223 = vmatpush.msra.mxu0 %v75
    %224 = vmatpush.msra.mxu0 %v74
    %225 = vmatpush.msra.mxu0 %v73
    %226 = vmatpush.msra.mxu0 %v72
    %227 = vmatpush.msra.mxu0 %v71
    %228 = vmatpush.msra.mxu0 %v70
    %229 = vmatpush.msra.mxu0 %v69
    %230 = vmatpush.msra.mxu0 %v68
    %231 = vmatpush.msra.mxu0 %v67
    %232 = vmatpush.msra.mxu0 %v66
    %233 = vmatpush.msra.mxu0 %v65
    %234 = vmatpush.msra.mxu0 %v64
    %235 = vmatpush.msra.mxu0 %v63
    %236 = vmatpush.msra.mxu0 %v62
    %237 = vmatpush.msra.mxu0 %v61
    %238 = vmatmul.f32.gmra.mxu0 %v168
    %v239 = vpop.f32.mrf.mxu0
    %v240 = vadd.f32 %v220, %v239
    %241 = vdwg.mxu0
    %242 = vmatpush.msra.mxu0 %v92
    %243 = vmatpush.msra.mxu0 %v91
    %244 = vmatpush.msra.mxu0 %v90
    %245 = vmatpush.msra.mxu0 %v89
    %246 = vmatpush.msra.mxu0 %v88
    %247 = vmatpush.msra.mxu0 %v87
    %248 = vmatpush.msra.mxu0 %v86
    %249 = vmatpush.msra.mxu0 %v85
    %250 = vmatpush.msra.mxu0 %v84
    %251 = vmatpush.msra.mxu0 %v83
    %252 = vmatpush.msra.mxu0 %v82
    %253 = vmatpush.msra.mxu0 %v81
    %254 = vmatpush.msra.mxu0 %v80
    %255 = vmatpush.msra.mxu0 %v79
    %256 = vmatpush.msra.mxu0 %v78
    %257 = vmatpush.msra.mxu0 %v77
    %258 = vmatmul.f32.gmra.mxu0 %v169
    %v259 = vpop.f32.mrf.mxu0
    %v260 = vadd.f32 %v240, %v259
    %261 = vdwg.mxu0
    %262 = vmatpush.msra.mxu0 %v108
    %263 = vmatpush.msra.mxu0 %v107
    %264 = vmatpush.msra.mxu0 %v106
    %265 = vmatpush.msra.mxu0 %v105
    %266 = vmatpush.msra.mxu0 %v104
    %267 = vmatpush.msra.mxu0 %v103
    %268 = vmatpush.msra.mxu0 %v102
    %269 = vmatpush.msra.mxu0 %v101
    %270 = vmatpush.msra.mxu0 %v100
    %271 = vmatpush.msra.mxu0 %v99
    %272 = vmatpush.msra.mxu0 %v98
    %273 = vmatpush.msra.mxu0 %v97
    %274 = vmatpush.msra.mxu0 %v96
    %275 = vmatpush.msra.mxu0 %v95
    %276 = vmatpush.msra.mxu0 %v94
    %277 = vmatpush.msra.mxu0 %v93
    %278 = vmatmul.f32.gmra.mxu0 %v170
    %v279 = vpop.f32.mrf.mxu0
    %v280 = vadd.f32 %v260, %v279
    %281 = vdwg.mxu0
    %282 = vmatpush.msra.mxu0 %v124
    %283 = vmatpush.msra.mxu0 %v123
    %284 = vmatpush.msra.mxu0 %v122
    %285 = vmatpush.msra.mxu0 %v121
    %286 = vmatpush.msra.mxu0 %v120
    %287 = vmatpush.msra.mxu0 %v119
    %288 = vmatpush.msra.mxu0 %v118
    %289 = vmatpush.msra.mxu0 %v117
    %290 = vmatpush.msra.mxu0 %v116
    %291 = vmatpush.msra.mxu0 %v115
    %292 = vmatpush.msra.mxu0 %v114
    %293 = vmatpush.msra.mxu0 %v113
    %294 = vmatpush.msra.mxu0 %v112
    %295 = vmatpush.msra.mxu0 %v111
    %296 = vmatpush.msra.mxu0 %v110
    %297 = vmatpush.msra.mxu0 %v109
    %298 = vmatmul.f32.gmra.mxu0 %v171
    %v299 = vpop.f32.mrf.mxu0
    %v300 = vadd.f32 %v280, %v299
    %301 = vdwg.mxu0
    %302 = vmatpush.msra.mxu0 %v140
    %303 = vmatpush.msra.mxu0 %v139
    %304 = vmatpush.msra.mxu0 %v138
    %305 = vmatpush.msra.mxu0 %v137
    %306 = vmatpush.msra.mxu0 %v136
    %307 = vmatpush.msra.mxu0 %v135
    %308 = vmatpush.msra.mxu0 %v134
    %309 = vmatpush.msra.mxu0 %v133
    %310 = vmatpush.msra.mxu0 %v132
    %311 = vmatpush.msra.mxu0 %v131
    %312 = vmatpush.msra.mxu0 %v130
    %313 = vmatpush.msra.mxu0 %v129
    %314 = vmatpush.msra.mxu0 %v128
    %315 = vmatpush.msra.mxu0 %v127
    %316 = vmatpush.msra.mxu0 %v126
    %317 = vmatpush.msra.mxu0 %v125
    %318 = vmatmul.f32.gmra.mxu0 %v172
    %v319 = vpop.f32.mrf.mxu0
    %v320 = vadd.f32 %v300, %v319
    %321 = vdwg.mxu0
    %322 = vmatpush.msra.mxu0 %v156
    %323 = vmatpush.msra.mxu0 %v155
    %324 = vmatpush.msra.mxu0 %v154
    %325 = vmatpush.msra.mxu0 %v153
    %326 = vmatpush.msra.mxu0 %v152
    %327 = vmatpush.msra.mxu0 %v151
    %328 = vmatpush.msra.mxu0 %v150
    %329 = vmatpush.msra.mxu0 %v149
    %330 = vmatpush.msra.mxu0 %v148
    %331 = vmatpush.msra.mxu0 %v147
    %332 = vmatpush.msra.mxu0 %v146
    %333 = vmatpush.msra.mxu0 %v145
    %334 = vmatpush.msra.mxu0 %v144
    %335 = vmatpush.msra.mxu0 %v143
    %336 = vmatpush.msra.mxu0 %v142
    %337 = vmatpush.msra.mxu0 %v141
    %338 = vmatmul.f32.gmra.mxu0 %v173
    %v339 = vpop.f32.mrf.mxu0
    %v340 = vadd.f32 %v320, %v339
    %341 = vdwg.mxu0
    %vm342 = vcmp.ge.f32.partialorder %v340, 0.0
    %v343 = vmul.f32 %v340, 0.33
    %v344 = vsel %vm342, %v340, %v343
    %v345 = vld [vmem:[%s3] sm:$0xff]
    %v346 = vld [vmem:[%s3 + $0x8] sm:$0xff]
    %v347 = vld [vmem:[%s3 + $0x10] sm:$0xff]
    %v348 = vld [vmem:[%s3 + $0x18] sm:$0xff]
    %v349 = vld [vmem:[%s3 + $0x20] sm:$0xff]
    %v350 = vld [vmem:[%s3 + $0x28] sm:$0xff]
    %v351 = vld [vmem:[%s3 + $0x30] sm:$0xff]
    %v352 = vld [vmem:[%s3 + $0x38] sm:$0xff]
    %v353 = vld [vmem:[%s3 + $0x40] sm:$0xff]
    %v354 = vld [vmem:[%s3 + $0x48] sm:$0xff]
    %v355 = vld [vmem:[%s3 + $0x50] sm:$0xff]
    %v356 = vld [vmem:[%s3 + $0x58] sm:$0xff]
    %v357 = vld [vmem:[%s3 + $0x60] sm:$0xff]
    %v358 = vld [vmem:[%s3 + $0x68] sm:$0xff]
    %v359 = vld [vmem:[%s3 + $0x70] sm:$0xff]
    %v360 = vld [vmem:[%s3 + $0x78] sm:$0xff]
    %v361 = vld [vmem:[%s4] sm:$0x1]
    %v363 = vperm.slane %v361, 0
    %365 = vmatpush.msra.mxu0 %v360
    %366 = vmatpush.msra.mxu0 %v359
    %367 = vmatpush.msra.mxu0 %v358
    %368 = vmatpush.msra.mxu0 %v357
    %369 = vmatpush.msra.mxu0 %v356
    %370 = vmatpush.msra.mxu0 %v355
    %371 = vmatpush.msra.mxu0 %v354
    %372 = vmatpush.msra.mxu0 %v353
    %373 = vmatpush.msra.mxu0 %v352
    %374 = vmatpush.msra.mxu0 %v351
    %375 = vmatpush.msra.mxu0 %v350
    %376 = vmatpush.msra.mxu0 %v349
    %377 = vmatpush.msra.mxu0 %v348
    %378 = vmatpush.msra.mxu0 %v347
    %379 = vmatpush.msra.mxu0 %v346
    %380 = vmatpush.msra.mxu0 %v345
    %381 = vmatmul.f32.gmra.mxu0 %v344
    %v382 = vpop.f32.mrf.mxu0
    %v383 = vadd.f32 %v363, %v382
    %384 = vdwg.mxu0
    %vm385 = vcmp.ge.f32.partialorder %v383, 0.0
    %v386 = vmul.f32 %v383, 0.33
    %v387 = vsel %vm385, %v383, %v386
    %v388 = vld [vmem:[%s5] sm:$0xff]
    %v389 = vld [vmem:[%s5 + $0x8] sm:$0xff]
    %v390 = vld [vmem:[%s5 + $0x10] sm:$0xff]
    %v391 = vld [vmem:[%s5 + $0x18] sm:$0xff]
    %v392 = vld [vmem:[%s5 + $0x20] sm:$0xff]
    %v393 = vld [vmem:[%s5 + $0x28] sm:$0xff]
    %v394 = vld [vmem:[%s5 + $0x30] sm:$0xff]
    %v395 = vld [vmem:[%s5 + $0x38] sm:$0xff]
    %v396 = vld [vmem:[%s6] sm:$0x1]
    %v398 = vperm.slane %v396, 0
    %vm400 = vcmask 523264
    %v402 = vsel %vm400, %v387, 0
    %404 = vmatpush.msra.mxu0 0.0
    %405 = vmatpush.msra.mxu0 0.0
    %406 = vmatpush.msra.mxu0 0.0
    %407 = vmatpush.msra.mxu0 0.0
    %408 = vmatpush.msra.mxu0 0.0
    %409 = vmatpush.msra.mxu0 0.0
    %410 = vmatpush.msra.mxu0 0.0
    %411 = vmatpush.msra.mxu0 0.0
    %412 = vmatpush.msra.mxu0 %v395
    %413 = vmatpush.msra.mxu0 %v394
    %414 = vmatpush.msra.mxu0 %v393
    %415 = vmatpush.msra.mxu0 %v392
    %416 = vmatpush.msra.mxu0 %v391
    %417 = vmatpush.msra.mxu0 %v390
    %418 = vmatpush.msra.mxu0 %v389
    %419 = vmatpush.msra.mxu0 %v388
    %420 = vmatmul.f32.gmra.mxu0 %v402
    %v421 = vpop.f32.mrf.mxu0
    %v422 = vadd.f32 %v398, %v421
    %423 = vdwg.mxu0
    %vm424 = vcmp.ge.f32.partialorder %v422, 0.0
    %v425 = vmul.f32 %v422, 0.33
    %v426 = vsel %vm424, %v422, %v425
    %vm427 = vcmask 9216
    %v428 = vsel %vm427, %v426, -inf
    %429 = vmax.xlane.f32.xlu0 %v428
    %v430 = vpop.xlane.xlu0 %429
    %v431 = vsub.f32 %v426, %v430
    %v432 = vmul.f32 %v431, 1.442695
    %v433 = vpow.pop %v432
    %v434 = vsel %vm427, %v433, 0.0
    %435 = vadd.xlane.f32.xlu0 %v434
    %v436 = vpop.xlane.xlu0 %435
    %v437 = vlog2.pop %v436
    %v438 = vmul.f32 %v437, 0.6931472
    %v439 = vadd.f32 %v430, %v438
    %v440 = vsub.f32 %v426, %v439
    %441 = vst.msk [vmem:[#allocation2] sm:$0x3] %vm427, %v440
    // Predicated region
    $region30: #{brainnetcnn_forward.5} parent=1 // pred_check
      _
    $region31: #{brainnetcnn_forward.5} parent=1 // pred_check_branch
      %443 = sbr.rel (0) target = $region33
    $region32: #{brainnetcnn_forward.5} parent=1 // pred_region
      %445 = vsyncadd [#allocation3], 0
      %s447 = sshll.u32 [#allocation2], 4
      %s448 = int_to_ptr.vmem [resolvable:$true] %s447
      %s449 = sshll.u32 %s7, 4
      %s450 = int_to_ptr.hbm [resolvable:$true] %s449
      %452 = dma.vmem_to_hbm [thread:$0]  %s448, 32, %s450, [#allocation3]
    $region33: #{brainnetcnn_forward.5} parent=1 // pred_fallthru
      _
    // Predicated region
    $region34: #{brainnetcnn_forward.5} parent=1 // pred_check
      _
    $region35: #{brainnetcnn_forward.5} parent=1 // pred_check_branch
      %454 = sbr.rel (0) target = $region37
    $region36: #{brainnetcnn_forward.5} parent=1 // pred_region
      %456 = dma.done [#allocation3], 32
    $region37: #{brainnetcnn_forward.5} parent=1 // pred_fallthru
      _
    %457 = vsyncpa [#allocation3], 1

</llo_original>
